<compile_context>
chip_gen: v7x
topology: tpu7x:2x2x1
jax: 0.10.0
libtpu: 0.0.40
codegen_flags: <defaults>
</compile_context>

<pallas_src>
import numpy as np
import jax
import jax.numpy as jnp
from jax.experimental import pallas as pl
from jax.experimental.pallas import tpu as pltpu


def _round_up(x, m):
    return ((x + m - 1) // m) * m


def _pick_batch_block(n, ho, target_rows=512, min_rows=256):
    """Images packed per grid step (batch folded into the matmul M dimension)."""
    stride = ho + 1
    divs = [d for d in range(1, n + 1) if n % d == 0]
    target = max(1, -(-target_rows // stride))
    best = max([d for d in divs if d <= target] or [1])
    # Prefer >=2 grid steps (v7x megacore) when M would stay large enough anyway.
    two_step = [d for d in divs if n // d >= 2 and d * stride - 1 >= min_rows and d <= target]
    if two_step:
        best = max(two_step)
    return best


def _band_weights(w, Wo, lin_pad, lout_pad):
    """(3,3,Ci,Co) HWIO conv weight -> (3, lin_pad, lout_pad) block-banded bf16.

    band[ky][xi*Ci+ci, xo*Co+co] = w[ky, kx, ci, co] with kx = xi - xo + 1 when
    0 <= kx < 3 (else 0): the horizontal taps and the horizontal 'same' padding
    are folded into one matmul per vertical tap ky.  Fully traceable (jnp.kron
    against constant shifted identities) so it works under jax.jit.
    """
    _, _, Ci, Co = w.shape
    mats = []
    for ky in range(3):
        m = jnp.zeros((Wo * Ci, Wo * Co), jnp.float32)
        for kx in range(3):
            eye = jnp.asarray(np.eye(Wo, k=1 - kx, dtype=np.float32))
            m = m + jnp.kron(eye, w[ky, kx].astype(jnp.float32))
        m = jnp.pad(m, ((0, lin_pad - Wo * Ci), (0, lout_pad - Wo * Co)))
        mats.append(m)
    return jnp.stack(mats, axis=0).astype(jnp.bfloat16)


# ------------------------------ fused kernel ------------------------------- #
def _make_fused_kernel(pool, B_blk, Ho, Rcore, Rbuf, Lin, Lout):
    stride = Ho + 1                               # rows per packed image (+1 separator)
    img_end = 1 + (B_blk - 1) * stride + Ho       # exclusive end of last image's rows

    def band_conv_relu(src, w_ref, brow, keep):
        """One 3x3 'same' conv + bias + ReLU in banded form.

        src:  (Rbuf, L) f32 padded stacked activations (buffer row i+1 = core row i).
        w_ref:(3, L, Lout) bf16 block-banded weights (one per vertical tap ky).
        """
        srcb = src.astype(jnp.bfloat16)           # cast once per layer, slice 3x
        acc = None
        for ky in range(3):                       # 3 MXU matmuls per layer
            d = jnp.dot(srcb[ky:ky + Rcore, :], w_ref[ky],
                        preferred_element_type=jnp.float32)
            acc = d if acc is None else acc + d
        # keep zeroes the inter-image separator rows and the M-alignment slack so
        # the next layer's vertical taps see zeros there ('same' vertical padding).
        return jnp.maximum(acc + brow, 0.0) * keep          # (Rcore, Lout) f32

    def kernel(keep_ref, x_ref, w1_ref, w2_ref, w3_ref, b_ref, o_ref, buf0, buf1):
        f32 = jnp.float32
        # ---- zero ONLY the padding / separator rows (interiors are overwritten).
        # Unconditional each step -> correct under v7x megacore grid sharding.
        buf0[0:1, :] = jnp.zeros((1, Lin), f32)
        buf1[0:1, :] = jnp.zeros((1, Lout), f32)
        buf1[Rbuf - 1:Rbuf, :] = jnp.zeros((1, Lout), f32)
        for b in range(B_blk - 1):                # separators between packed images
            s = 1 + b * stride + Ho
            buf0[s:s + 1, :] = jnp.zeros((1, Lin), f32)
        # bottom pad of the last image + M-alignment slack rows
        buf0[img_end:Rbuf, :] = jnp.zeros((Rbuf - img_end, Lin), f32)

        # ---- AvgPool2d(2,2,ceil) == plain 2x2 mean for even H/W:
        # pure VPU reduction over the 4 pre-de-interleaved phase slabs.
        if pool:
            pooled = 0.25 * (x_ref[0, 0].astype(f32) + x_ref[0, 1].astype(f32)
                             + x_ref[1, 0].astype(f32) + x_ref[1, 1].astype(f32))
        else:
            pooled = x_ref[0, 0].astype(f32)      # (B_blk, Ho, Lin)
        for b in range(B_blk):                    # stack images along the row dim
            r0 = 1 + b * stride
            buf0[r0:r0 + Ho, :] = pooled[b]

        keep = keep_ref[...]                      # (Rcore, 1) f32
        bias = b_ref[...].astype(f32)             # (3, Lout)

        # ---- 3x (Conv2d 3x3 pad=1 + ReLU), everything resident in VMEM.
        a = band_conv_relu(buf0[...], w1_ref, bias[0:1, :], keep)
        buf1[1:1 + Rcore, :] = a
        a = band_conv_relu(buf1[...], w2_ref, bias[1:2, :], keep)
        buf1[1:1 + Rcore, :] = a
        a = band_conv_relu(buf1[...], w3_ref, bias[2:3, :], keep)

        # ---- lane-dense output: one (Ho, Lout) slab per packed image.
        for b in range(B_blk):
            r0 = b * stride
            o_ref[b] = a[r0:r0 + Ho, :].astype(o_ref.dtype)

    return kernel


# ------------------------------ DownConvBlock ------------------------------ #
def down_conv_block(x_nchw, params, pool=True):
    """Forward pass of DownConvBlock (padding=1, norm=False) on NCHW input."""
    N, Cin, H, W = x_nchw.shape
    (w1, b1), (w2, b2), (w3, b3) = params
    Cout = w1.shape[-1]

    if pool:
        # TODO(synk): AvgPool2d ceil_mode=True edge handling for odd H/W not implemented.
        assert H % 2 == 0 and W % 2 == 0, "even spatial dims assumed"
        Ho, Wo = H // 2, W // 2
        # NCHW -> (dy, dx, N, Ho, Wo*Cin): the 2x2 pooling de-interleave is folded
        # into the channels-last boundary transpose (one XLA copy, outside the kernel).
        x_arr = (x_nchw.reshape(N, Cin, Ho, 2, Wo, 2)
                 .transpose(3, 5, 0, 2, 4, 1)
                 .reshape(2, 2, N, Ho, Wo * Cin))
        npool = 2
    else:
        Ho, Wo = H, W
        x_arr = x_nchw.transpose(0, 2, 3, 1).reshape(1, 1, N, Ho, Wo * Cin)
        npool = 1

    lane_in, lane_out = Wo * Cin, Wo * Cout
    Lin, Lout = _round_up(lane_in, 128), _round_up(lane_out, 128)

    # Band-matrix design is for the small-channel / small-width regime of this block.
    band_bytes = 2 * 3 * (Lin * Lout + 2 * Lout * Lout)        # bf16 bytes
    assert band_bytes <= 8 * 1024 * 1024, (
        "banded weights too large; TODO(synk): pixel-major im2col path for large Wo*C")

    if Lin > lane_in:   # lane-dense input (unmasked loads); fused into the transpose by XLA
        x_arr = jnp.pad(x_arr, ((0, 0),) * 4 + ((0, Lin - lane_in),))

    B_blk = _pick_batch_block(N, Ho)
    stride = Ho + 1
    Rcore = _round_up(B_blk * stride - 1, 8)      # matmul M per grid step, 8-aligned
    Rbuf = Rcore + 2                              # + top/bottom zero rows

    # Block-banded weights (horizontal taps + horizontal padding folded in), bf16.
    w1b = _band_weights(w1, Wo, Lin, Lout)
    w2b = _band_weights(w2, Wo, Lout, Lout)
    w3b = _band_weights(w3, Wo, Lout, Lout)
    biases = jnp.stack([jnp.pad(jnp.tile(bb, Wo), (0, Lout - lane_out))
                        for bb in (b1, b2, b3)], axis=0).astype(jnp.float32)

    # Keep-mask over the stacked core rows: 1 on real image rows, 0 on inter-image
    # separator rows and on the M-alignment padding rows.
    idx = np.arange(Rcore)
    keep = jnp.asarray((((idx % stride) < Ho) & (idx < B_blk * stride - 1))
                       .astype(np.float32).reshape(Rcore, 1))

    kernel = _make_fused_kernel(pool, B_blk, Ho, Rcore, Rbuf, Lin, Lout)
    out = pl.pallas_call(
        kernel,
        out_shape=jax.ShapeDtypeStruct((N, Ho, Lout), x_nchw.dtype),
        grid=(N // B_blk,),
        in_specs=[
            pl.BlockSpec((Rcore, 1), lambda n: (0, 0)),
            pl.BlockSpec((npool, npool, B_blk, Ho, Lin), lambda n: (0, 0, n, 0, 0)),
            pl.BlockSpec((3, Lin, Lout), lambda n: (0, 0, 0)),
            pl.BlockSpec((3, Lout, Lout), lambda n: (0, 0, 0)),
            pl.BlockSpec((3, Lout, Lout), lambda n: (0, 0, 0)),
            pl.BlockSpec((3, Lout), lambda n: (0, 0)),
        ],
        out_specs=pl.BlockSpec((B_blk, Ho, Lout), lambda n: (n, 0, 0)),
        scratch_shapes=[
            pltpu.VMEM((Rbuf, Lin), jnp.float32),    # padded stacked pooled input
            pltpu.VMEM((Rbuf, Lout), jnp.float32),   # padded stacked inter-layer act
        ],
        compiler_params=pltpu.CompilerParams(dimension_semantics=("parallel",)),
    )(keep, x_arr, w1b, w2b, w3b, biases)

    # Strip the lane padding and go back to NCHW (one boundary relayout in XLA).
    return out[:, :, :lane_out].reshape(N, Ho, Wo, Cout).transpose(0, 3, 1, 2)


# --------------------------------- params ---------------------------------- #
def init_params(key, input_dim, output_dim):
    """Deterministic synthetic init of the 3 conv layers (3x3 kernels, HWIO)."""
    keys = jax.random.split(key, 6)
    dims = [(input_dim, output_dim), (output_dim, output_dim), (output_dim, output_dim)]
    params = []
    for i, (cin, cout) in enumerate(dims):
        fan_in = cin * 9
        w = jax.random.normal(keys[2 * i], (3, 3, cin, cout), jnp.float32) / np.sqrt(fan_in)
        b = jax.random.normal(keys[2 * i + 1], (cout,), jnp.float32) * 0.01
        params.append((w, b))
    return params


# ------------------------------- reference --------------------------------- #
def _reference(x_nchw, params, pool=True):
    x = jnp.transpose(x_nchw, (0, 2, 3, 1))
    if pool:
        n, h, w, c = x.shape
        x = x.reshape(n, h // 2, 2, w // 2, 2, c).mean(axis=(2, 4))
    for wgt, b in params:
        x = jax.lax.conv_general_dilated(
            x, wgt, window_strides=(1, 1), padding="SAME",
            dimension_numbers=("NHWC", "HWIO", "NHWC")) + b
        x = jnp.maximum(x, 0.0)
    return jnp.transpose(x, (0, 3, 1, 2))


if __name__ == "__main__":
    key = jax.random.PRNGKey(0)
    k_x, k_p = jax.random.split(key)

    input_dim, output_dim = 4, 8
    x = jax.random.normal(k_x, (2, input_dim, 16, 16), jnp.float32)  # NCHW like PyTorch
    params = init_params(k_p, input_dim, output_dim)

    fwd = jax.jit(lambda a, p: down_conv_block(a, p, pool=True))
    out = jax.block_until_ready(fwd(x, params))

    # pool halves spatial dims (16 -> 8); convs keep them (padding=1)
    assert out.shape == (2, output_dim, 8, 8), out.shape
    assert bool(jnp.all(out >= 0.0))                                 # final ReLU
    ref = _reference(x, params, pool=True)
    err = float(jnp.max(jnp.abs(out - ref)))
    # bf16 MXU operands with f32 accumulation -> relaxed tolerance vs f32 reference
    assert err < 1e-1, f"max abs err vs reference: {err}"
    print("KERNEL_OK")
</pallas_src>

<mosaic_0001>
module attributes {stable_mosaic.version = 11 : i64} {
  func.func @kernel(%arg0: i32, %arg1: memref<24x1xf32, #tpu.memory_space<vmem>>, %arg2: memref<2x2x2x8x128xf32, #tpu.memory_space<vmem>>, %arg3: memref<3x128x128xbf16, #tpu.memory_space<vmem>>, %arg4: memref<3x128x128xbf16, #tpu.memory_space<vmem>>, %arg5: memref<3x128x128xbf16, #tpu.memory_space<vmem>>, %arg6: memref<3x128xf32, #tpu.memory_space<vmem>>, %arg7: memref<2x8x128xf32, #tpu.memory_space<vmem>>, %arg8: memref<26x128xf32, #tpu.memory_space<vmem>>, %arg9: memref<26x128xf32, #tpu.memory_space<vmem>>) attributes {dimension_semantics = [#tpu.dimension_semantics<parallel>], iteration_bounds = array<i64: 1>, scalar_prefetch = 0 : i64, scratch_operands = 2 : i64, tpu.core_type = #tpu.core_type<tc>, window_params = [{pipeline_mode = #tpu.pipeline_mode<synchronous>, transform_indices = @transform_0, window_bounds = array<i64: 24, 1>}, {transform_indices = @transform_1, window_bounds = array<i64: 2, 2, 2, 8, 128>}, {pipeline_mode = #tpu.pipeline_mode<synchronous>, transform_indices = @transform_2, window_bounds = array<i64: 3, 128, 128>}, {pipeline_mode = #tpu.pipeline_mode<synchronous>, transform_indices = @transform_3, window_bounds = array<i64: 3, 128, 128>}, {pipeline_mode = #tpu.pipeline_mode<synchronous>, transform_indices = @transform_4, window_bounds = array<i64: 3, 128, 128>}, {pipeline_mode = #tpu.pipeline_mode<synchronous>, transform_indices = @transform_5, window_bounds = array<i64: 3, 128>}, {transform_indices = @transform_6, window_bounds = array<i64: 2, 8, 128>}]} {
    %cst = arith.constant 0.000000e+00 : f32
    %0 = vector.broadcast %cst : f32 to vector<1x128xf32>
    %c0 = arith.constant 0 : index
    %c0_0 = arith.constant 0 : index
    %1 = vector.load %arg8[%c0, %c0_0] : memref<26x128xf32, #tpu.memory_space<vmem>>, vector<1x128xf32>
    tpu.vector_store %arg8[%c0, %c0_0], %0 {strides = array<i32>} : memref<26x128xf32, #tpu.memory_space<vmem>>, vector<1x128xf32>,
    %cst_1 = arith.constant 0.000000e+00 : f32
    %2 = vector.broadcast %cst_1 : f32 to vector<1x128xf32>
    %c0_2 = arith.constant 0 : index
    %c0_3 = arith.constant 0 : index
    %3 = vector.load %arg9[%c0_2, %c0_3] : memref<26x128xf32, #tpu.memory_space<vmem>>, vector<1x128xf32>
    tpu.vector_store %arg9[%c0_2, %c0_3], %2 {strides = array<i32>} : memref<26x128xf32, #tpu.memory_space<vmem>>, vector<1x128xf32>,
    %cst_4 = arith.constant 0.000000e+00 : f32
    %4 = vector.broadcast %cst_4 : f32 to vector<1x128xf32>
    %c25 = arith.constant 25 : index
    %c0_5 = arith.constant 0 : index
    %5 = vector.load %arg9[%c25, %c0_5] : memref<26x128xf32, #tpu.memory_space<vmem>>, vector<1x128xf32>
    tpu.vector_store %arg9[%c25, %c0_5], %4 {strides = array<i32>} : memref<26x128xf32, #tpu.memory_space<vmem>>, vector<1x128xf32>,
    %cst_6 = arith.constant 0.000000e+00 : f32
    %6 = vector.broadcast %cst_6 : f32 to vector<1x128xf32>
    %c9 = arith.constant 9 : index
    %c0_7 = arith.constant 0 : index
    %7 = vector.load %arg8[%c9, %c0_7] : memref<26x128xf32, #tpu.memory_space<vmem>>, vector<1x128xf32>
    tpu.vector_store %arg8[%c9, %c0_7], %6 {strides = array<i32>} : memref<26x128xf32, #tpu.memory_space<vmem>>, vector<1x128xf32>,
    %cst_8 = arith.constant 0.000000e+00 : f32
    %8 = vector.broadcast %cst_8 : f32 to vector<8x128xf32>
    %c18 = arith.constant 18 : index
    %c0_9 = arith.constant 0 : index
    %9 = vector.load %arg8[%c18, %c0_9] : memref<26x128xf32, #tpu.memory_space<vmem>>, vector<8x128xf32>
    tpu.vector_store %arg8[%c18, %c0_9], %8 {strides = array<i32>} : memref<26x128xf32, #tpu.memory_space<vmem>>, vector<8x128xf32>,
    %c0_10 = arith.constant 0 : index
    %c0_11 = arith.constant 0 : index
    %c0_12 = arith.constant 0 : index
    %c0_13 = arith.constant 0 : index
    %c0_14 = arith.constant 0 : index
    %10 = vector.load %arg2[%c0_10, %c0_11, %c0_12, %c0_13, %c0_14] : memref<2x2x2x8x128xf32, #tpu.memory_space<vmem>>, vector<1x1x2x8x128xf32>
    %11 = vector.shape_cast %10 : vector<1x1x2x8x128xf32> to vector<2x8x128xf32>
    %c0_15 = arith.constant 0 : index
    %c1 = arith.constant 1 : index
    %c0_16 = arith.constant 0 : index
    %c0_17 = arith.constant 0 : index
    %c0_18 = arith.constant 0 : index
    %12 = vector.load %arg2[%c0_15, %c1, %c0_16, %c0_17, %c0_18] : memref<2x2x2x8x128xf32, #tpu.memory_space<vmem>>, vector<1x1x2x8x128xf32>
    %13 = vector.shape_cast %12 : vector<1x1x2x8x128xf32> to vector<2x8x128xf32>
    %14 = arith.addf %11, %13 : vector<2x8x128xf32>
    %c1_19 = arith.constant 1 : index
    %c0_20 = arith.constant 0 : index
    %c0_21 = arith.constant 0 : index
    %c0_22 = arith.constant 0 : index
    %c0_23 = arith.constant 0 : index
    %15 = vector.load %arg2[%c1_19, %c0_20, %c0_21, %c0_22, %c0_23] : memref<2x2x2x8x128xf32, #tpu.memory_space<vmem>>, vector<1x1x2x8x128xf32>
    %16 = vector.shape_cast %15 : vector<1x1x2x8x128xf32> to vector<2x8x128xf32>
    %17 = arith.addf %14, %16 : vector<2x8x128xf32>
    %c1_24 = arith.constant 1 : index
    %c1_25 = arith.constant 1 : index
    %c0_26 = arith.constant 0 : index
    %c0_27 = arith.constant 0 : index
    %c0_28 = arith.constant 0 : index
    %18 = vector.load %arg2[%c1_24, %c1_25, %c0_26, %c0_27, %c0_28] : memref<2x2x2x8x128xf32, #tpu.memory_space<vmem>>, vector<1x1x2x8x128xf32>
    %19 = vector.shape_cast %18 : vector<1x1x2x8x128xf32> to vector<2x8x128xf32>
    %20 = arith.addf %17, %19 : vector<2x8x128xf32>
    %cst_29 = arith.constant 2.500000e-01 : f32
    %21 = vector.broadcast %cst_29 : f32 to vector<2x8x128xf32>
    %22 = arith.mulf %21, %20 : vector<2x8x128xf32>
    %23 = vector.extract_strided_slice %22 {offsets = [0, 0, 0], sizes = [1, 8, 128], strides = [1, 1, 1]} : vector<2x8x128xf32> to vector<1x8x128xf32>
    %24 = vector.shape_cast %23 : vector<1x8x128xf32> to vector<8x128xf32>
    %c1_30 = arith.constant 1 : index
    %c0_31 = arith.constant 0 : index
    %25 = vector.load %arg8[%c1_30, %c0_31] : memref<26x128xf32, #tpu.memory_space<vmem>>, vector<8x128xf32>
    tpu.vector_store %arg8[%c1_30, %c0_31], %24 {strides = array<i32>} : memref<26x128xf32, #tpu.memory_space<vmem>>, vector<8x128xf32>,
    %26 = vector.extract_strided_slice %22 {offsets = [1, 0, 0], sizes = [1, 8, 128], strides = [1, 1, 1]} : vector<2x8x128xf32> to vector<1x8x128xf32>
    %27 = vector.shape_cast %26 : vector<1x8x128xf32> to vector<8x128xf32>
    %c10 = arith.constant 10 : index
    %c0_32 = arith.constant 0 : index
    %28 = vector.load %arg8[%c10, %c0_32] : memref<26x128xf32, #tpu.memory_space<vmem>>, vector<8x128xf32>
    tpu.vector_store %arg8[%c10, %c0_32], %27 {strides = array<i32>} : memref<26x128xf32, #tpu.memory_space<vmem>>, vector<8x128xf32>,
    %c0_33 = arith.constant 0 : index
    %c0_34 = arith.constant 0 : index
    %29 = vector.load %arg1[%c0_33, %c0_34] : memref<24x1xf32, #tpu.memory_space<vmem>>, vector<24x1xf32>
    %c0_35 = arith.constant 0 : index
    %c0_36 = arith.constant 0 : index
    %30 = vector.load %arg6[%c0_35, %c0_36] : memref<3x128xf32, #tpu.memory_space<vmem>>, vector<3x128xf32>
    %c0_37 = arith.constant 0 : index
    %c0_38 = arith.constant 0 : index
    %31 = vector.load %arg8[%c0_37, %c0_38] : memref<26x128xf32, #tpu.memory_space<vmem>>, vector<26x128xf32>
    %32 = vector.extract_strided_slice %30 {offsets = [0, 0], sizes = [1, 128], strides = [1, 1]} : vector<3x128xf32> to vector<1x128xf32>
    %33 = arith.truncf %31 : vector<26x128xf32> to vector<26x128xbf16>
    %34 = vector.extract_strided_slice %33 {offsets = [0, 0], sizes = [24, 128], strides = [1, 1]} : vector<26x128xbf16> to vector<24x128xbf16>
    %c0_39 = arith.constant 0 : index
    %c0_40 = arith.constant 0 : index
    %c0_41 = arith.constant 0 : index
    %35 = vector.load %arg3[%c0_39, %c0_40, %c0_41] : memref<3x128x128xbf16, #tpu.memory_space<vmem>>, vector<1x128x128xbf16>
    %36 = vector.shape_cast %35 : vector<1x128x128xbf16> to vector<128x128xbf16>
    %cst_42 = arith.constant dense<0.000000e+00> : vector<24x128xf32>
    %37 = tpu.matmul %34, %36, %cst_42 {dimension_numbers = #tpu.dot_dimension_numbers<[1], [0], [0], [1], [0, 0, 1, 1], [], []>} : vector<24x128xbf16>, vector<128x128xbf16>, vector<24x128xf32> -> vector<24x128xf32>
    %38 = vector.extract_strided_slice %33 {offsets = [1, 0], sizes = [24, 128], strides = [1, 1]} : vector<26x128xbf16> to vector<24x128xbf16>
    %c1_43 = arith.constant 1 : index
    %c0_44 = arith.constant 0 : index
    %c0_45 = arith.constant 0 : index
    %39 = vector.load %arg3[%c1_43, %c0_44, %c0_45] : memref<3x128x128xbf16, #tpu.memory_space<vmem>>, vector<1x128x128xbf16>
    %40 = vector.shape_cast %39 : vector<1x128x128xbf16> to vector<128x128xbf16>
    %cst_46 = arith.constant dense<0.000000e+00> : vector<24x128xf32>
    %41 = tpu.matmul %38, %40, %cst_46 {dimension_numbers = #tpu.dot_dimension_numbers<[1], [0], [0], [1], [0, 0, 1, 1], [], []>} : vector<24x128xbf16>, vector<128x128xbf16>, vector<24x128xf32> -> vector<24x128xf32>
    %42 = arith.addf %37, %41 : vector<24x128xf32>
    %43 = vector.extract_strided_slice %33 {offsets = [2, 0], sizes = [24, 128], strides = [1, 1]} : vector<26x128xbf16> to vector<24x128xbf16>
    %c2 = arith.constant 2 : index
    %c0_47 = arith.constant 0 : index
    %c0_48 = arith.constant 0 : index
    %44 = vector.load %arg3[%c2, %c0_47, %c0_48] : memref<3x128x128xbf16, #tpu.memory_space<vmem>>, vector<1x128x128xbf16>
    %45 = vector.shape_cast %44 : vector<1x128x128xbf16> to vector<128x128xbf16>
    %cst_49 = arith.constant dense<0.000000e+00> : vector<24x128xf32>
    %46 = tpu.matmul %43, %45, %cst_49 {dimension_numbers = #tpu.dot_dimension_numbers<[1], [0], [0], [1], [0, 0, 1, 1], [], []>} : vector<24x128xbf16>, vector<128x128xbf16>, vector<24x128xf32> -> vector<24x128xf32>
    %47 = arith.addf %42, %46 : vector<24x128xf32>
    %48 = vector.broadcast %32 : vector<1x128xf32> to vector<24x128xf32>
    %49 = arith.addf %47, %48 : vector<24x128xf32>
    %cst_50 = arith.constant 0.000000e+00 : f32
    %50 = vector.broadcast %cst_50 : f32 to vector<24x128xf32>
    %51 = arith.maximumf %49, %50 : vector<24x128xf32>
    %52 = vector.broadcast %29 : vector<24x1xf32> to vector<24x128xf32>
    %53 = arith.mulf %51, %52 : vector<24x128xf32>
    %c1_51 = arith.constant 1 : index
    %c0_52 = arith.constant 0 : index
    %54 = vector.load %arg9[%c1_51, %c0_52] : memref<26x128xf32, #tpu.memory_space<vmem>>, vector<24x128xf32>
    tpu.vector_store %arg9[%c1_51, %c0_52], %53 {strides = array<i32>} : memref<26x128xf32, #tpu.memory_space<vmem>>, vector<24x128xf32>,
    %c0_53 = arith.constant 0 : index
    %c0_54 = arith.constant 0 : index
    %55 = vector.load %arg9[%c0_53, %c0_54] : memref<26x128xf32, #tpu.memory_space<vmem>>, vector<26x128xf32>
    %56 = vector.extract_strided_slice %30 {offsets = [1, 0], sizes = [1, 128], strides = [1, 1]} : vector<3x128xf32> to vector<1x128xf32>
    %57 = arith.truncf %55 : vector<26x128xf32> to vector<26x128xbf16>
    %58 = vector.extract_strided_slice %57 {offsets = [0, 0], sizes = [24, 128], strides = [1, 1]} : vector<26x128xbf16> to vector<24x128xbf16>
    %c0_55 = arith.constant 0 : index
    %c0_56 = arith.constant 0 : index
    %c0_57 = arith.constant 0 : index
    %59 = vector.load %arg4[%c0_55, %c0_56, %c0_57] : memref<3x128x128xbf16, #tpu.memory_space<vmem>>, vector<1x128x128xbf16>
    %60 = vector.shape_cast %59 : vector<1x128x128xbf16> to vector<128x128xbf16>
    %cst_58 = arith.constant dense<0.000000e+00> : vector<24x128xf32>
    %61 = tpu.matmul %58, %60, %cst_58 {dimension_numbers = #tpu.dot_dimension_numbers<[1], [0], [0], [1], [0, 0, 1, 1], [], []>} : vector<24x128xbf16>, vector<128x128xbf16>, vector<24x128xf32> -> vector<24x128xf32>
    %62 = vector.extract_strided_slice %57 {offsets = [1, 0], sizes = [24, 128], strides = [1, 1]} : vector<26x128xbf16> to vector<24x128xbf16>
    %c1_59 = arith.constant 1 : index
    %c0_60 = arith.constant 0 : index
    %c0_61 = arith.constant 0 : index
    %63 = vector.load %arg4[%c1_59, %c0_60, %c0_61] : memref<3x128x128xbf16, #tpu.memory_space<vmem>>, vector<1x128x128xbf16>
    %64 = vector.shape_cast %63 : vector<1x128x128xbf16> to vector<128x128xbf16>
    %cst_62 = arith.constant dense<0.000000e+00> : vector<24x128xf32>
    %65 = tpu.matmul %62, %64, %cst_62 {dimension_numbers = #tpu.dot_dimension_numbers<[1], [0], [0], [1], [0, 0, 1, 1], [], []>} : vector<24x128xbf16>, vector<128x128xbf16>, vector<24x128xf32> -> vector<24x128xf32>
    %66 = arith.addf %61, %65 : vector<24x128xf32>
    %67 = vector.extract_strided_slice %57 {offsets = [2, 0], sizes = [24, 128], strides = [1, 1]} : vector<26x128xbf16> to vector<24x128xbf16>
    %c2_63 = arith.constant 2 : index
    %c0_64 = arith.constant 0 : index
    %c0_65 = arith.constant 0 : index
    %68 = vector.load %arg4[%c2_63, %c0_64, %c0_65] : memref<3x128x128xbf16, #tpu.memory_space<vmem>>, vector<1x128x128xbf16>
    %69 = vector.shape_cast %68 : vector<1x128x128xbf16> to vector<128x128xbf16>
    %cst_66 = arith.constant dense<0.000000e+00> : vector<24x128xf32>
    %70 = tpu.matmul %67, %69, %cst_66 {dimension_numbers = #tpu.dot_dimension_numbers<[1], [0], [0], [1], [0, 0, 1, 1], [], []>} : vector<24x128xbf16>, vector<128x128xbf16>, vector<24x128xf32> -> vector<24x128xf32>
    %71 = arith.addf %66, %70 : vector<24x128xf32>
    %72 = vector.broadcast %56 : vector<1x128xf32> to vector<24x128xf32>
    %73 = arith.addf %71, %72 : vector<24x128xf32>
    %cst_67 = arith.constant 0.000000e+00 : f32
    %74 = vector.broadcast %cst_67 : f32 to vector<24x128xf32>
    %75 = arith.maximumf %73, %74 : vector<24x128xf32>
    %76 = vector.broadcast %29 : vector<24x1xf32> to vector<24x128xf32>
    %77 = arith.mulf %75, %76 : vector<24x128xf32>
    %c1_68 = arith.constant 1 : index
    %c0_69 = arith.constant 0 : index
    %78 = vector.load %arg9[%c1_68, %c0_69] : memref<26x128xf32, #tpu.memory_space<vmem>>, vector<24x128xf32>
    tpu.vector_store %arg9[%c1_68, %c0_69], %77 {strides = array<i32>} : memref<26x128xf32, #tpu.memory_space<vmem>>, vector<24x128xf32>,
    %c0_70 = arith.constant 0 : index
    %c0_71 = arith.constant 0 : index
    %79 = vector.load %arg9[%c0_70, %c0_71] : memref<26x128xf32, #tpu.memory_space<vmem>>, vector<26x128xf32>
    %80 = vector.extract_strided_slice %30 {offsets = [2, 0], sizes = [1, 128], strides = [1, 1]} : vector<3x128xf32> to vector<1x128xf32>
    %81 = arith.truncf %79 : vector<26x128xf32> to vector<26x128xbf16>
    %82 = vector.extract_strided_slice %81 {offsets = [0, 0], sizes = [24, 128], strides = [1, 1]} : vector<26x128xbf16> to vector<24x128xbf16>
    %c0_72 = arith.constant 0 : index
    %c0_73 = arith.constant 0 : index
    %c0_74 = arith.constant 0 : index
    %83 = vector.load %arg5[%c0_72, %c0_73, %c0_74] : memref<3x128x128xbf16, #tpu.memory_space<vmem>>, vector<1x128x128xbf16>
    %84 = vector.shape_cast %83 : vector<1x128x128xbf16> to vector<128x128xbf16>
    %cst_75 = arith.constant dense<0.000000e+00> : vector<24x128xf32>
    %85 = tpu.matmul %82, %84, %cst_75 {dimension_numbers = #tpu.dot_dimension_numbers<[1], [0], [0], [1], [0, 0, 1, 1], [], []>} : vector<24x128xbf16>, vector<128x128xbf16>, vector<24x128xf32> -> vector<24x128xf32>
    %86 = vector.extract_strided_slice %81 {offsets = [1, 0], sizes = [24, 128], strides = [1, 1]} : vector<26x128xbf16> to vector<24x128xbf16>
    %c1_76 = arith.constant 1 : index
    %c0_77 = arith.constant 0 : index
    %c0_78 = arith.constant 0 : index
    %87 = vector.load %arg5[%c1_76, %c0_77, %c0_78] : memref<3x128x128xbf16, #tpu.memory_space<vmem>>, vector<1x128x128xbf16>
    %88 = vector.shape_cast %87 : vector<1x128x128xbf16> to vector<128x128xbf16>
    %cst_79 = arith.constant dense<0.000000e+00> : vector<24x128xf32>
    %89 = tpu.matmul %86, %88, %cst_79 {dimension_numbers = #tpu.dot_dimension_numbers<[1], [0], [0], [1], [0, 0, 1, 1], [], []>} : vector<24x128xbf16>, vector<128x128xbf16>, vector<24x128xf32> -> vector<24x128xf32>
    %90 = arith.addf %85, %89 : vector<24x128xf32>
    %91 = vector.extract_strided_slice %81 {offsets = [2, 0], sizes = [24, 128], strides = [1, 1]} : vector<26x128xbf16> to vector<24x128xbf16>
    %c2_80 = arith.constant 2 : index
    %c0_81 = arith.constant 0 : index
    %c0_82 = arith.constant 0 : index
    %92 = vector.load %arg5[%c2_80, %c0_81, %c0_82] : memref<3x128x128xbf16, #tpu.memory_space<vmem>>, vector<1x128x128xbf16>
    %93 = vector.shape_cast %92 : vector<1x128x128xbf16> to vector<128x128xbf16>
    %cst_83 = arith.constant dense<0.000000e+00> : vector<24x128xf32>
    %94 = tpu.matmul %91, %93, %cst_83 {dimension_numbers = #tpu.dot_dimension_numbers<[1], [0], [0], [1], [0, 0, 1, 1], [], []>} : vector<24x128xbf16>, vector<128x128xbf16>, vector<24x128xf32> -> vector<24x128xf32>
    %95 = arith.addf %90, %94 : vector<24x128xf32>
    %96 = vector.broadcast %80 : vector<1x128xf32> to vector<24x128xf32>
    %97 = arith.addf %95, %96 : vector<24x128xf32>
    %cst_84 = arith.constant 0.000000e+00 : f32
    %98 = vector.broadcast %cst_84 : f32 to vector<24x128xf32>
    %99 = arith.maximumf %97, %98 : vector<24x128xf32>
    %100 = vector.broadcast %29 : vector<24x1xf32> to vector<24x128xf32>
    %101 = arith.mulf %99, %100 : vector<24x128xf32>
    %102 = vector.extract_strided_slice %101 {offsets = [0, 0], sizes = [8, 128], strides = [1, 1]} : vector<24x128xf32> to vector<8x128xf32>
    %c0_85 = arith.constant 0 : index
    %c0_86 = arith.constant 0 : index
    %c0_87 = arith.constant 0 : index
    %103 = vector.load %arg7[%c0_85, %c0_86, %c0_87] : memref<2x8x128xf32, #tpu.memory_space<vmem>>, vector<1x8x128xf32>
    %104 = vector.shape_cast %103 : vector<1x8x128xf32> to vector<8x128xf32>
    %105 = vector.shape_cast %102 : vector<8x128xf32> to vector<1x8x128xf32>
    tpu.vector_store %arg7[%c0_85, %c0_86, %c0_87], %105 {strides = array<i32>} : memref<2x8x128xf32, #tpu.memory_space<vmem>>, vector<1x8x128xf32>,
    %106 = vector.extract_strided_slice %101 {offsets = [9, 0], sizes = [8, 128], strides = [1, 1]} : vector<24x128xf32> to vector<8x128xf32>
    %c1_88 = arith.constant 1 : index
    %c0_89 = arith.constant 0 : index
    %c0_90 = arith.constant 0 : index
    %107 = vector.load %arg7[%c1_88, %c0_89, %c0_90] : memref<2x8x128xf32, #tpu.memory_space<vmem>>, vector<1x8x128xf32>
    %108 = vector.shape_cast %107 : vector<1x8x128xf32> to vector<8x128xf32>
    %109 = vector.shape_cast %106 : vector<8x128xf32> to vector<1x8x128xf32>
    tpu.vector_store %arg7[%c1_88, %c0_89, %c0_90], %109 {strides = array<i32>} : memref<2x8x128xf32, #tpu.memory_space<vmem>>, vector<1x8x128xf32>,
    return
  }
  func.func @transform_0(%arg0: i32) -> (i32, i32) {
    %c0_i32 = arith.constant 0 : i32
    %c0_i32_0 = arith.constant 0 : i32
    %c0_i32_1 = arith.constant 0 : i32
    return %c0_i32, %c0_i32_0 : i32, i32
  }
  func.func @transform_1(%arg0: i32) -> (i32, i32, i32, i32, i32) {
    %c0_i32 = arith.constant 0 : i32
    %c0_i32_0 = arith.constant 0 : i32
    %c0_i32_1 = arith.constant 0 : i32
    %c0_i32_2 = arith.constant 0 : i32
    %c0_i32_3 = arith.constant 0 : i32
    return %c0_i32, %c0_i32_0, %arg0, %c0_i32_1, %c0_i32_2 : i32, i32, i32, i32, i32
  }
  func.func @transform_2(%arg0: i32) -> (i32, i32, i32) {
    %c0_i32 = arith.constant 0 : i32
    %c0_i32_0 = arith.constant 0 : i32
    %c0_i32_1 = arith.constant 0 : i32
    %c0_i32_2 = arith.constant 0 : i32
    return %c0_i32, %c0_i32_0, %c0_i32_1 : i32, i32, i32
  }
  func.func @transform_3(%arg0: i32) -> (i32, i32, i32) {
    %c0_i32 = arith.constant 0 : i32
    %c0_i32_0 = arith.constant 0 : i32
    %c0_i32_1 = arith.constant 0 : i32
    %c0_i32_2 = arith.constant 0 : i32
    return %c0_i32, %c0_i32_0, %c0_i32_1 : i32, i32, i32
  }
  func.func @transform_4(%arg0: i32) -> (i32, i32, i32) {
    %c0_i32 = arith.constant 0 : i32
    %c0_i32_0 = arith.constant 0 : i32
    %c0_i32_1 = arith.constant 0 : i32
    %c0_i32_2 = arith.constant 0 : i32
    return %c0_i32, %c0_i32_0, %c0_i32_1 : i32, i32, i32
  }
  func.func @transform_5(%arg0: i32) -> (i32, i32) {
    %c0_i32 = arith.constant 0 : i32
    %c0_i32_0 = arith.constant 0 : i32
    %c0_i32_1 = arith.constant 0 : i32
    return %c0_i32, %c0_i32_0 : i32, i32
  }
  func.func @transform_6(%arg0: i32) -> (i32, i32, i32) {
    %c0_i32 = arith.constant 0 : i32
    %c0_i32_0 = arith.constant 0 : i32
    %c0_i32_1 = arith.constant 0 : i32
    return %arg0, %c0_i32, %c0_i32_0 : i32, i32, i32
  }
}

</mosaic_0001>

<llo_original>
// kernel: tile.23
$region0: #{tile.23}
  #allocation0 [shape = 's32[1]{0}', space=sflag, size = 0x4, scoped, tag = 'scoped memory for tile.23']
  %s0 = inlined_call_operand.vmem [shape: f32[8], index: 0, kind: input, shape index: {}]
  %s1 = inlined_call_operand.vmem [shape: f32[8,8], index: 1, kind: output, shape index: {}]
  // Predicated region
  $region2: #{tile.23} parent=0 // pred_check
    _
  $region3: #{tile.23} parent=0 // pred_check_branch
    %3 = sbr.rel (0) target = $region5
  $region4: #{tile.23} parent=0 // pred_region
    _
  $region5: #{tile.23} parent=0 // pred_fallthru
    _
  %v4 = vld [vmem:[%s0] ss:$0 sm:$0xff]
  %5 = vst [vmem:[%s1] sm:$0xff] %v4

// kernel: tile.24
$region0: #{tile.24}
  %s0 = inlined_call_operand.vmem [shape: f32[8,8], index: 0, kind: input, shape index: {}]
  %s1 = inlined_call_operand.vmem [shape: f32[64], index: 1, kind: output, shape index: {}]
  $region1: #{tile.24} parent=0
    #allocation0 [shape = 'u8[4096]{0}', space=vmem, size = 0x1000, scoped, tag = 'scoped mem for output reshape']
    %v2 = vld [vmem:[%s0] sm:$0x1]
    %vm3 = vcmask 64512
    %4 = vst.msk [vmem:[#allocation0] sm:$0x1] %vm3, %v2
    %s5 = scalar_lea.vmem %s0, 7
    %v6 = vld [vmem:[%s5] sm:$0x1]
    %7 = vrot.lane.b32.xlu0 %v6, 56
    %v8 = vpop.permute.xlu0 %7
    %vm9 = vcmask 523712
    %10 = vst.msk [vmem:[#allocation0] sm:$0x1] %vm9, %v8
    %s11 = scalar_lea.vmem %s0, 6
    %v12 = vld [vmem:[%s11] sm:$0x1]
    %13 = vrot.lane.b32.xlu0 %v12, 48
    %v14 = vpop.permute.xlu0 %13
    %vm15 = vcmask 458112
    %16 = vst.msk [vmem:[#allocation0] sm:$0x1] %vm15, %v14
    %s17 = scalar_lea.vmem %s0, 5
    %v18 = vld [vmem:[%s17] sm:$0x1]
    %19 = vrot.lane.b32.xlu0 %v18, 40
    %v20 = vpop.permute.xlu0 %19
    %vm21 = vcmask 392512
    %22 = vst.msk [vmem:[#allocation0] sm:$0x1] %vm21, %v20
    %s23 = scalar_lea.vmem %s0, 4
    %v24 = vld [vmem:[%s23] sm:$0x1]
    %25 = vrot.lane.b32.xlu0 %v24, 32
    %v26 = vpop.permute.xlu0 %25
    %vm27 = vcmask 326912
    %28 = vst.msk [vmem:[#allocation0] sm:$0x1] %vm27, %v26
    %s29 = scalar_lea.vmem %s0, 3
    %v30 = vld [vmem:[%s29] sm:$0x1]
    %31 = vrot.lane.b32.xlu0 %v30, 24
    %v32 = vpop.permute.xlu0 %31
    %vm33 = vcmask 261312
    %34 = vst.msk [vmem:[#allocation0] sm:$0x1] %vm33, %v32
    %s35 = scalar_lea.vmem %s0, 2
    %v36 = vld [vmem:[%s35] sm:$0x1]
    %37 = vrot.lane.b32.xlu0 %v36, 16
    %v38 = vpop.permute.xlu0 %37
    %vm39 = vcmask 195712
    %40 = vst.msk [vmem:[#allocation0] sm:$0x1] %vm39, %v38
    %s41 = scalar_lea.vmem %s0, 1
    %v42 = vld [vmem:[%s41] sm:$0x1]
    %43 = vrot.lane.b32.xlu0 %v42, 8
    %v44 = vpop.permute.xlu0 %43
    %vm45 = vcmask 130112
    %46 = vst.msk [vmem:[#allocation0] sm:$0x1] %vm45, %v44
    %s48 = sshllo.u32 0, 1
    %v50 = vld [vmem:[#allocation0] sm:%s48]
    %s51 = sshllo.u32 0, 1
    %52 = vst [vmem:[%s1] sm:%s51] %v50

// kernel: _lambda_.1
$region0: #{_lambda_.1}
  #allocation0 [shape = 'u32[]', space=smem, size = 0x4, offset = 0x4, fixed_abs, tag = 'smem constant byte address 0x4 - core index']
  #allocation1 [shape = 'u32[144,128]{1,0:T(1,128)}', space=vmem, size = 0x12000, scoped, tag = 'internal scratch']
  #allocation2 [shape = 'f32[26,128]{1,0:T(8,128)}', space=vmem, size = 0x4000, scoped, tag = 'scratch operand']
  #allocation3 [shape = 'f32[26,128]{1,0:T(8,128)}', space=vmem, size = 0x4000, scoped, tag = 'scratch operand']
  %s0 = inlined_call_operand.vmem [shape: f32[24,1], index: 0, kind: input, shape index: {}]
  %s1 = inlined_call_operand.vmem [shape: f32[2,2,2,8,128], index: 1, kind: input, shape index: {}]
  %s2 = inlined_call_operand.vmem [shape: bf16[3,128,128], index: 2, kind: input, shape index: {}]
  %s3 = inlined_call_operand.vmem [shape: bf16[3,128,128], index: 3, kind: input, shape index: {}]
  %s4 = inlined_call_operand.vmem [shape: bf16[3,128,128], index: 4, kind: input, shape index: {}]
  %s5 = inlined_call_operand.vmem [shape: f32[3,128], index: 5, kind: input, shape index: {}]
  %s6 = inlined_call_operand.vmem [shape: f32[2,8,128], index: 6, kind: output, shape index: {}]
  %s7 = sld [smem:[#allocation0]]
  $region34: #{_lambda_.1} parent=0
    _
  %s9 = ssub.s32 1, %s7
  %s10 = scalar_select 0, %s9, %s7
  // Predicated region
  $region2: #{_lambda_.1} parent=0 // pred_check
    _
  $region3: #{_lambda_.1} parent=0 // pred_check_branch
    %12 = sbr.rel (0) target = $region5
  $region4: #{_lambda_.1} parent=0 // pred_region
    _
  $region5: #{_lambda_.1} parent=0 // pred_fallthru
    _
  // Predicated region
  $region6: #{_lambda_.1} parent=0 // pred_check
    _
  $region7: #{_lambda_.1} parent=0 // pred_check_branch
    %14 = sbr.rel (0) target = $region9
  $region8: #{_lambda_.1} parent=0 // pred_region
    _
  $region9: #{_lambda_.1} parent=0 // pred_fallthru
    _
  // Predicated region
  $region10: #{_lambda_.1} parent=0 // pred_check
    _
  $region11: #{_lambda_.1} parent=0 // pred_check_branch
    %16 = sbr.rel (0) target = $region13
  $region12: #{_lambda_.1} parent=0 // pred_region
    _
  $region13: #{_lambda_.1} parent=0 // pred_fallthru
    _
  // Predicated region
  $region14: #{_lambda_.1} parent=0 // pred_check
    _
  $region15: #{_lambda_.1} parent=0 // pred_check_branch
    %18 = sbr.rel (0) target = $region17
  $region16: #{_lambda_.1} parent=0 // pred_region
    _
  $region17: #{_lambda_.1} parent=0 // pred_fallthru
    _
  // Predicated region
  $region18: #{_lambda_.1} parent=0 // pred_check
    _
  $region19: #{_lambda_.1} parent=0 // pred_check_branch
    %20 = sbr.rel (0) target = $region21
  $region20: #{_lambda_.1} parent=0 // pred_region
    _
  $region21: #{_lambda_.1} parent=0 // pred_fallthru
    _
  // Predicated region
  $region22: #{_lambda_.1} parent=0 // pred_check
    _
  $region23: #{_lambda_.1} parent=0 // pred_check_branch
    %22 = sbr.rel (0) target = $region25
  $region24: #{_lambda_.1} parent=0 // pred_region
    _
  $region25: #{_lambda_.1} parent=0 // pred_fallthru
    _
  %24 = vst [vmem:[#allocation2] sm:$0x1] 0.0
  %25 = vst [vmem:[#allocation3] sm:$0x1] 0.0
  %26 = vst [vmem:[#allocation3 + $0x19] sm:$0x1] 0.0
  %27 = vst [vmem:[#allocation2 + $0x9] sm:$0x1] 0.0
  %28 = vst [vmem:[#allocation2 + $0x12] sm:$0xff] 0.0
  %v29 = vld [vmem:[%s1] sm:$0xff]
  %v30 = vld [vmem:[%s1 + $0x8] sm:$0xff]
  %s31 = scalar_lea.vmem %s1, 16
  %v32 = vld [vmem:[%s31] sm:$0xff]
  %v33 = vld [vmem:[%s31 + $0x8] sm:$0xff]
  %v34 = vadd.f32 %v29, %v32
  %v35 = vadd.f32 %v30, %v33
  %s36 = scalar_lea.vmem %s1, 32
  %v37 = vld [vmem:[%s36] sm:$0xff]
  %v38 = vld [vmem:[%s36 + $0x8] sm:$0xff]
  %v39 = vadd.f32 %v34, %v37
  %v40 = vadd.f32 %v35, %v38
  %s41 = scalar_lea.vmem %s1, 48
  %v42 = vld [vmem:[%s41] sm:$0xff]
  %v43 = vld [vmem:[%s41 + $0x8] sm:$0xff]
  %v44 = vadd.f32 %v39, %v42
  %v45 = vadd.f32 %v40, %v43
  %v46 = vmul.f32 %v44, 0.25
  %v47 = vmul.f32 %v45, 0.25
  %48 = vst [vmem:[#allocation2 + $0x1] sm:$0xff] %v46
  %49 = vst [vmem:[#allocation2 + $0xa] sm:$0xff] %v47
  %v50 = vld [vmem:[%s0] sm:$0xff]
  %v51 = vld [vmem:[%s0 + $0x8] sm:$0xff]
  %v52 = vld [vmem:[%s0 + $0x10] sm:$0xff]
  %v53 = vld [vmem:[%s5] sm:$0x7]
  %v54 = vld [vmem:[#allocation2] sm:$0xff]
  %v55 = vld [vmem:[#allocation2 + $0x8] sm:$0xff]
  %v56 = vld [vmem:[#allocation2 + $0x10] sm:$0xff]
  %v57 = vld [vmem:[#allocation2 + $0x18] sm:$0x3]
  %v58 = vpack.c.bf16 %v55, %v54
  %v59 = vpack.c.bf16 %v57, %v56
  %v60 = vld [vmem:[%s2] sm:$0xf]
  %v61 = vld [vmem:[%s2 + $0x4] sm:$0xf]
  %v62 = vld [vmem:[%s2 + $0x8] sm:$0xf]
  %v63 = vld [vmem:[%s2 + $0xc] sm:$0xf]
  %v64 = vld [vmem:[%s2 + $0x10] sm:$0xf]
  %v65 = vld [vmem:[%s2 + $0x14] sm:$0xf]
  %v66 = vld [vmem:[%s2 + $0x18] sm:$0xf]
  %v67 = vld [vmem:[%s2 + $0x1c] sm:$0xf]
  %v68 = vld [vmem:[%s2 + $0x20] sm:$0xf]
  %v69 = vld [vmem:[%s2 + $0x24] sm:$0xf]
  %v70 = vld [vmem:[%s2 + $0x28] sm:$0xf]
  %v71 = vld [vmem:[%s2 + $0x2c] sm:$0xf]
  %v72 = vld [vmem:[%s2 + $0x30] sm:$0xf]
  %v73 = vld [vmem:[%s2 + $0x34] sm:$0xf]
  %v74 = vld [vmem:[%s2 + $0x38] sm:$0xf]
  %v75 = vld [vmem:[%s2 + $0x3c] sm:$0xf]
  %s76 = scalar_lea.vmem %s2, 64
  %v77 = vld [vmem:[%s76] sm:$0xf]
  %v78 = vld [vmem:[%s76 + $0x4] sm:$0xf]
  %v79 = vld [vmem:[%s76 + $0x8] sm:$0xf]
  %v80 = vld [vmem:[%s76 + $0xc] sm:$0xf]
  %v81 = vld [vmem:[%s76 + $0x10] sm:$0xf]
  %v82 = vld [vmem:[%s76 + $0x14] sm:$0xf]
  %v83 = vld [vmem:[%s76 + $0x18] sm:$0xf]
  %v84 = vld [vmem:[%s76 + $0x1c] sm:$0xf]
  %v85 = vld [vmem:[%s76 + $0x20] sm:$0xf]
  %v86 = vld [vmem:[%s76 + $0x24] sm:$0xf]
  %v87 = vld [vmem:[%s76 + $0x28] sm:$0xf]
  %v88 = vld [vmem:[%s76 + $0x2c] sm:$0xf]
  %v89 = vld [vmem:[%s76 + $0x30] sm:$0xf]
  %v90 = vld [vmem:[%s76 + $0x34] sm:$0xf]
  %v91 = vld [vmem:[%s76 + $0x38] sm:$0xf]
  %v92 = vld [vmem:[%s76 + $0x3c] sm:$0xf]
  %vm93 = vsmask.f32 7424
  %v95 = vshrl.u32 %v58, 16
  %v97 = vshll.u32 %v58, 16
  %v99 = vrot.slane %v97, 1
  %v100 = vor.u32 %v95, %v99
  %v102 = vshll.u32 %v59, 16
  %v104 = vrot.slane %v102, 1
  %v105 = vsel %vm93, %v100, %v104
  %v106 = vshrl.u32 %v59, 16
  %v108 = vor.u32 %v106, %v104
  %v127 = vunpack.c.l.b16 %v77
  %v128 = vunpack.c.l.b16 %v78
  %v129 = vunpack.c.l.b16 %v79
  %v130 = vunpack.c.l.b16 %v80
  %v131 = vunpack.c.l.b16 %v81
  %v132 = vunpack.c.l.b16 %v82
  %v133 = vunpack.c.l.b16 %v83
  %v134 = vunpack.c.l.b16 %v84
  %v135 = vunpack.c.l.b16 %v85
  %v136 = vunpack.c.l.b16 %v86
  %v137 = vunpack.c.l.b16 %v87
  %v138 = vunpack.c.l.b16 %v88
  %v139 = vunpack.c.l.b16 %v89
  %v140 = vunpack.c.l.b16 %v90
  %v141 = vunpack.c.l.b16 %v91
  %v142 = vunpack.c.l.b16 %v92
  %v143 = vpack.c.b16 %v128, %v127
  %v144 = vpack.c.b16 %v130, %v129
  %v145 = vpack.c.b16 %v132, %v131
  %v146 = vpack.c.b16 %v134, %v133
  %v147 = vpack.c.b16 %v136, %v135
  %v148 = vpack.c.b16 %v138, %v137
  %v149 = vpack.c.b16 %v140, %v139
  %v150 = vpack.c.b16 %v142, %v141
  %159 = vmatprep.subr.bf16.mxu0 0
  %160 = vmatpush1.bf16.msra.mxu0 %v143
  %161 = vmatprep.subr.bf16.mxu0 0
  %162 = vmatpush1.bf16.msra.mxu0 %v144
  %163 = vmatprep.subr.bf16.mxu0 0
  %164 = vmatpush1.bf16.msra.mxu0 %v145
  %165 = vmatprep.subr.bf16.mxu0 0
  %166 = vmatpush1.bf16.msra.mxu0 %v146
  %167 = vmatprep.subr.bf16.mxu0 0
  %168 = vmatpush1.bf16.msra.mxu0 %v147
  %169 = vmatprep.subr.bf16.mxu0 0
  %170 = vmatpush1.bf16.msra.mxu0 %v148
  %171 = vmatprep.subr.bf16.mxu0 0
  %172 = vmatpush1.bf16.msra.mxu0 %v149
  %173 = vmatprep.subr.bf16.mxu0 0
  %174 = vmatpush1.bf16.msra.mxu0 %v150
  %175 = vmatprep.subr.bf16.mxu0 0
  %176 = vmatpush1.bf16.msra.mxu0 0
  %177 = vmatprep.subr.bf16.mxu0 0
  %178 = vmatpush1.bf16.msra.mxu0 0
  %179 = vmatprep.subr.bf16.mxu0 0
  %180 = vmatpush1.bf16.msra.mxu0 0
  %181 = vmatprep.subr.bf16.mxu0 0
  %182 = vmatpush1.bf16.msra.mxu0 0
  %183 = vmatprep.subr.bf16.mxu0 0
  %184 = vmatpush1.bf16.msra.mxu0 0
  %185 = vmatprep.subr.bf16.mxu0 0
  %186 = vmatpush1.bf16.msra.mxu0 0
  %187 = vmatprep.subr.bf16.mxu0 0
  %188 = vmatpush1.bf16.msra.mxu0 0
  %189 = vmatprep.subr.bf16.mxu0 0
  %190 = vmatpush1.bf16.msra.mxu0 0
  %191 = vmatprep.mubr.bf16.mxu0 0
  %192 = vmatmul.mubr.bf16.gmra.mrb[0].mxu0 %v105
  %v193 = vpop.f32.mrb[0].mxu0
  %v194 = vadd.f32 0.0, %v193
  %v195 = vpop.f32.mrb[0].mxu0
  %v196 = vpop.f32.mrb[0].mxu0
  %v197 = vadd.f32 0.0, %v196
  %v198 = vpop.f32.mrb[0].mxu0
  %199 = vmatprep.mubr.bf16.mxu0 0
  %200 = vmatmul.mubr.bf16.gmra.mrb[0].mxu0 %v108
  %v201 = vpop.f32.mrb[0].mxu0
  %v202 = vadd.f32 0.0, %v201
  %v203 = vpop.f32.mrb[0].mxu0
  %v204 = vpop.f32.mrb[0].mxu0
  %v205 = vpop.f32.mrb[0].mxu0
  %206 = vdwg.mxu0
  %v223 = vunpack.c.l.b16 %v60
  %v224 = vunpack.c.l.b16 %v61
  %v225 = vunpack.c.l.b16 %v62
  %v226 = vunpack.c.l.b16 %v63
  %v227 = vunpack.c.l.b16 %v64
  %v228 = vunpack.c.l.b16 %v65
  %v229 = vunpack.c.l.b16 %v66
  %v230 = vunpack.c.l.b16 %v67
  %v231 = vunpack.c.l.b16 %v68
  %v232 = vunpack.c.l.b16 %v69
  %v233 = vunpack.c.l.b16 %v70
  %v234 = vunpack.c.l.b16 %v71
  %v235 = vunpack.c.l.b16 %v72
  %v236 = vunpack.c.l.b16 %v73
  %v237 = vunpack.c.l.b16 %v74
  %v238 = vunpack.c.l.b16 %v75
  %v239 = vpack.c.b16 %v224, %v223
  %v240 = vpack.c.b16 %v226, %v225
  %v241 = vpack.c.b16 %v228, %v227
  %v242 = vpack.c.b16 %v230, %v229
  %v243 = vpack.c.b16 %v232, %v231
  %v244 = vpack.c.b16 %v234, %v233
  %v245 = vpack.c.b16 %v236, %v235
  %v246 = vpack.c.b16 %v238, %v237
  %255 = vmatprep.subr.bf16.mxu0 0
  %256 = vmatpush1.bf16.msra.mxu0 %v239
  %257 = vmatprep.subr.bf16.mxu0 0
  %258 = vmatpush1.bf16.msra.mxu0 %v240
  %259 = vmatprep.subr.bf16.mxu0 0
  %260 = vmatpush1.bf16.msra.mxu0 %v241
  %261 = vmatprep.subr.bf16.mxu0 0
  %262 = vmatpush1.bf16.msra.mxu0 %v242
  %263 = vmatprep.subr.bf16.mxu0 0
  %264 = vmatpush1.bf16.msra.mxu0 %v243
  %265 = vmatprep.subr.bf16.mxu0 0
  %266 = vmatpush1.bf16.msra.mxu0 %v244
  %267 = vmatprep.subr.bf16.mxu0 0
  %268 = vmatpush1.bf16.msra.mxu0 %v245
  %269 = vmatprep.subr.bf16.mxu0 0
  %270 = vmatpush1.bf16.msra.mxu0 %v246
  %271 = vmatprep.subr.bf16.mxu0 0
  %272 = vmatpush1.bf16.msra.mxu0 0
  %273 = vmatprep.subr.bf16.mxu0 0
  %274 = vmatpush1.bf16.msra.mxu0 0
  %275 = vmatprep.subr.bf16.mxu0 0
  %276 = vmatpush1.bf16.msra.mxu0 0
  %277 = vmatprep.subr.bf16.mxu0 0
  %278 = vmatpush1.bf16.msra.mxu0 0
  %279 = vmatprep.subr.bf16.mxu0 0
  %280 = vmatpush1.bf16.msra.mxu0 0
  %281 = vmatprep.subr.bf16.mxu0 0
  %282 = vmatpush1.bf16.msra.mxu0 0
  %283 = vmatprep.subr.bf16.mxu0 0
  %284 = vmatpush1.bf16.msra.mxu0 0
  %285 = vmatprep.subr.bf16.mxu0 0
  %286 = vmatpush1.bf16.msra.mxu0 0
  %287 = vmatprep.mubr.bf16.mxu0 0
  %288 = vmatmul.mubr.bf16.gmra.mrb[0].mxu0 %v58
  %v289 = vpop.f32.mrb[0].mxu0
  %v290 = vadd.f32 %v194, %v289
  %v291 = vpop.f32.mrb[0].mxu0
  %v292 = vpop.f32.mrb[0].mxu0
  %v293 = vadd.f32 %v197, %v292
  %v294 = vpop.f32.mrb[0].mxu0
  %295 = vmatprep.mubr.bf16.mxu0 0
  %296 = vmatmul.mubr.bf16.gmra.mrb[0].mxu0 %v59
  %v297 = vpop.f32.mrb[0].mxu0
  %v298 = vadd.f32 %v202, %v297
  %v299 = vpop.f32.mrb[0].mxu0
  %v300 = vpop.f32.mrb[0].mxu0
  %v301 = vpop.f32.mrb[0].mxu0
  %302 = vdwg.mxu0
  %s303 = scalar_lea.vmem %s2, 128
  %v304 = vld [vmem:[%s303] sm:$0xf]
  %v305 = vld [vmem:[%s303 + $0x4] sm:$0xf]
  %v306 = vld [vmem:[%s303 + $0x8] sm:$0xf]
  %v307 = vld [vmem:[%s303 + $0xc] sm:$0xf]
  %v308 = vld [vmem:[%s303 + $0x10] sm:$0xf]
  %v309 = vld [vmem:[%s303 + $0x14] sm:$0xf]
  %v310 = vld [vmem:[%s303 + $0x18] sm:$0xf]
  %v311 = vld [vmem:[%s303 + $0x1c] sm:$0xf]
  %v312 = vld [vmem:[%s303 + $0x20] sm:$0xf]
  %v313 = vld [vmem:[%s303 + $0x24] sm:$0xf]
  %v314 = vld [vmem:[%s303 + $0x28] sm:$0xf]
  %v315 = vld [vmem:[%s303 + $0x2c] sm:$0xf]
  %v316 = vld [vmem:[%s303 + $0x30] sm:$0xf]
  %v317 = vld [vmem:[%s303 + $0x34] sm:$0xf]
  %v318 = vld [vmem:[%s303 + $0x38] sm:$0xf]
  %v319 = vld [vmem:[%s303 + $0x3c] sm:$0xf]
  %vm322 = vcmask 1046528
  %v323 = vrot.slane %v58, 1
  %v324 = vrot.slane %v59, 1
  %v325 = vsel %vm322, %v323, %v324
  %v344 = vunpack.c.l.b16 %v304
  %v345 = vunpack.c.l.b16 %v305
  %v346 = vunpack.c.l.b16 %v306
  %v347 = vunpack.c.l.b16 %v307
  %v348 = vunpack.c.l.b16 %v308
  %v349 = vunpack.c.l.b16 %v309
  %v350 = vunpack.c.l.b16 %v310
  %v351 = vunpack.c.l.b16 %v311
  %v352 = vunpack.c.l.b16 %v312
  %v353 = vunpack.c.l.b16 %v313
  %v354 = vunpack.c.l.b16 %v314
  %v355 = vunpack.c.l.b16 %v315
  %v356 = vunpack.c.l.b16 %v316
  %v357 = vunpack.c.l.b16 %v317
  %v358 = vunpack.c.l.b16 %v318
  %v359 = vunpack.c.l.b16 %v319
  %v360 = vpack.c.b16 %v345, %v344
  %v361 = vpack.c.b16 %v347, %v346
  %v362 = vpack.c.b16 %v349, %v348
  %v363 = vpack.c.b16 %v351, %v350
  %v364 = vpack.c.b16 %v353, %v352
  %v365 = vpack.c.b16 %v355, %v354
  %v366 = vpack.c.b16 %v357, %v356
  %v367 = vpack.c.b16 %v359, %v358
  %376 = vmatprep.subr.bf16.mxu0 0
  %377 = vmatpush1.bf16.msra.mxu0 %v360
  %378 = vmatprep.subr.bf16.mxu0 0
  %379 = vmatpush1.bf16.msra.mxu0 %v361
  %380 = vmatprep.subr.bf16.mxu0 0
  %381 = vmatpush1.bf16.msra.mxu0 %v362
  %382 = vmatprep.subr.bf16.mxu0 0
  %383 = vmatpush1.bf16.msra.mxu0 %v363
  %384 = vmatprep.subr.bf16.mxu0 0
  %385 = vmatpush1.bf16.msra.mxu0 %v364
  %386 = vmatprep.subr.bf16.mxu0 0
  %387 = vmatpush1.bf16.msra.mxu0 %v365
  %388 = vmatprep.subr.bf16.mxu0 0
  %389 = vmatpush1.bf16.msra.mxu0 %v366
  %390 = vmatprep.subr.bf16.mxu0 0
  %391 = vmatpush1.bf16.msra.mxu0 %v367
  %392 = vmatprep.subr.bf16.mxu0 0
  %393 = vmatpush1.bf16.msra.mxu0 0
  %394 = vmatprep.subr.bf16.mxu0 0
  %395 = vmatpush1.bf16.msra.mxu0 0
  %396 = vmatprep.subr.bf16.mxu0 0
  %397 = vmatpush1.bf16.msra.mxu0 0
  %398 = vmatprep.subr.bf16.mxu0 0
  %399 = vmatpush1.bf16.msra.mxu0 0
  %400 = vmatprep.subr.bf16.mxu0 0
  %401 = vmatpush1.bf16.msra.mxu0 0
  %402 = vmatprep.subr.bf16.mxu0 0
  %403 = vmatpush1.bf16.msra.mxu0 0
  %404 = vmatprep.subr.bf16.mxu0 0
  %405 = vmatpush1.bf16.msra.mxu0 0
  %406 = vmatprep.subr.bf16.mxu0 0
  %407 = vmatpush1.bf16.msra.mxu0 0
  %408 = vmatprep.mubr.bf16.mxu0 0
  %409 = vmatmul.mubr.bf16.gmra.mrb[0].mxu0 %v325
  %v410 = vpop.f32.mrb[0].mxu0
  %v411 = vadd.f32 0.0, %v410
  %v412 = vpop.f32.mrb[0].mxu0
  %v413 = vpop.f32.mrb[0].mxu0
  %v414 = vadd.f32 0.0, %v413
  %v415 = vpop.f32.mrb[0].mxu0
  %416 = vmatprep.mubr.bf16.mxu0 0
  %417 = vmatmul.mubr.bf16.gmra.mrb[0].mxu0 %v324
  %v418 = vpop.f32.mrb[0].mxu0
  %v419 = vadd.f32 0.0, %v418
  %v420 = vpop.f32.mrb[0].mxu0
  %v421 = vpop.f32.mrb[0].mxu0
  %v422 = vpop.f32.mrb[0].mxu0
  %423 = vdwg.mxu0
  %v424 = vadd.f32 %v290, %v411
  %v425 = vadd.f32 %v293, %v414
  %v426 = vadd.f32 %v298, %v419
  %v427 = vlaneseq
  %v428 = vshrl.u32 %v427, 7
  %v429 = vsub.s32 0, %v428
  %v430 = vrot.slane %v53, %v429
  %v431 = vadd.f32 %v424, %v430
  %v432 = vadd.f32 %v425, %v430
  %v433 = vadd.f32 %v426, %v430
  %v434 = vmax.f32 %v431, 0.0
  %v435 = vmax.f32 %v432, 0.0
  %v436 = vmax.f32 %v433, 0.0
  %438 = vset.pattern.permute.xlu0 0
  %439 = vperm.xlu0 %438, %v50
  %v440 = vpop.permute.xlu0 %439
  %443 = vset.pattern.permute.xlu0 0
  %444 = vperm.xlu0 %443, %v51
  %v445 = vpop.permute.xlu0 %444
  %448 = vset.pattern.permute.xlu0 0
  %449 = vperm.xlu0 %448, %v52
  %v450 = vpop.permute.xlu0 %449
  %v452 = vmul.f32 %v434, %v440
  %v453 = vmul.f32 %v435, %v445
  %v454 = vmul.f32 %v436, %v450
  %455 = vst [vmem:[#allocation3 + $0x1] sm:$0xff] %v452
  %456 = vst [vmem:[#allocation3 + $0x9] sm:$0xff] %v453
  %457 = vst [vmem:[#allocation3 + $0x11] sm:$0xff] %v454
  %v458 = vld [vmem:[#allocation3] sm:$0xff]
  %v459 = vld [vmem:[#allocation3 + $0x8] sm:$0xff]
  %v460 = vld [vmem:[#allocation3 + $0x10] sm:$0xff]
  %v461 = vld [vmem:[#allocation3 + $0x18] sm:$0x3]
  %v462 = vpack.c.bf16 %v459, %v458
  %v463 = vpack.c.bf16 %v461, %v460
  %v464 = vld [vmem:[%s3] sm:$0xf]
  %v465 = vld [vmem:[%s3 + $0x4] sm:$0xf]
  %v466 = vld [vmem:[%s3 + $0x8] sm:$0xf]
  %v467 = vld [vmem:[%s3 + $0xc] sm:$0xf]
  %v468 = vld [vmem:[%s3 + $0x10] sm:$0xf]
  %v469 = vld [vmem:[%s3 + $0x14] sm:$0xf]
  %v470 = vld [vmem:[%s3 + $0x18] sm:$0xf]
  %v471 = vld [vmem:[%s3 + $0x1c] sm:$0xf]
  %v472 = vld [vmem:[%s3 + $0x20] sm:$0xf]
  %v473 = vld [vmem:[%s3 + $0x24] sm:$0xf]
  %v474 = vld [vmem:[%s3 + $0x28] sm:$0xf]
  %v475 = vld [vmem:[%s3 + $0x2c] sm:$0xf]
  %v476 = vld [vmem:[%s3 + $0x30] sm:$0xf]
  %v477 = vld [vmem:[%s3 + $0x34] sm:$0xf]
  %v478 = vld [vmem:[%s3 + $0x38] sm:$0xf]
  %v479 = vld [vmem:[%s3 + $0x3c] sm:$0xf]
  %s480 = scalar_lea.vmem %s3, 64
  %v481 = vld [vmem:[%s480] sm:$0xf]
  %v482 = vld [vmem:[%s480 + $0x4] sm:$0xf]
  %v483 = vld [vmem:[%s480 + $0x8] sm:$0xf]
  %v484 = vld [vmem:[%s480 + $0xc] sm:$0xf]
  %v485 = vld [vmem:[%s480 + $0x10] sm:$0xf]
  %v486 = vld [vmem:[%s480 + $0x14] sm:$0xf]
  %v487 = vld [vmem:[%s480 + $0x18] sm:$0xf]
  %v488 = vld [vmem:[%s480 + $0x1c] sm:$0xf]
  %v489 = vld [vmem:[%s480 + $0x20] sm:$0xf]
  %v490 = vld [vmem:[%s480 + $0x24] sm:$0xf]
  %v491 = vld [vmem:[%s480 + $0x28] sm:$0xf]
  %v492 = vld [vmem:[%s480 + $0x2c] sm:$0xf]
  %v493 = vld [vmem:[%s480 + $0x30] sm:$0xf]
  %v494 = vld [vmem:[%s480 + $0x34] sm:$0xf]
  %v495 = vld [vmem:[%s480 + $0x38] sm:$0xf]
  %v496 = vld [vmem:[%s480 + $0x3c] sm:$0xf]
  %v498 = vshrl.u32 %v462, 16
  %v500 = vshll.u32 %v462, 16
  %v502 = vrot.slane %v500, 1
  %v503 = vor.u32 %v498, %v502
  %v505 = vshll.u32 %v463, 16
  %v507 = vrot.slane %v505, 1
  %v508 = vsel %vm93, %v503, %v507
  %v509 = vshrl.u32 %v463, 16
  %v511 = vor.u32 %v509, %v507
  %v530 = vunpack.c.l.b16 %v481
  %v531 = vunpack.c.l.b16 %v482
  %v532 = vunpack.c.l.b16 %v483
  %v533 = vunpack.c.l.b16 %v484
  %v534 = vunpack.c.l.b16 %v485
  %v535 = vunpack.c.l.b16 %v486
  %v536 = vunpack.c.l.b16 %v487
  %v537 = vunpack.c.l.b16 %v488
  %v538 = vunpack.c.l.b16 %v489
  %v539 = vunpack.c.l.b16 %v490
  %v540 = vunpack.c.l.b16 %v491
  %v541 = vunpack.c.l.b16 %v492
  %v542 = vunpack.c.l.b16 %v493
  %v543 = vunpack.c.l.b16 %v494
  %v544 = vunpack.c.l.b16 %v495
  %v545 = vunpack.c.l.b16 %v496
  %v546 = vpack.c.b16 %v531, %v530
  %v547 = vpack.c.b16 %v533, %v532
  %v548 = vpack.c.b16 %v535, %v534
  %v549 = vpack.c.b16 %v537, %v536
  %v550 = vpack.c.b16 %v539, %v538
  %v551 = vpack.c.b16 %v541, %v540
  %v552 = vpack.c.b16 %v543, %v542
  %v553 = vpack.c.b16 %v545, %v544
  %562 = vmatprep.subr.bf16.mxu0 0
  %563 = vmatpush1.bf16.msra.mxu0 %v546
  %564 = vmatprep.subr.bf16.mxu0 0
  %565 = vmatpush1.bf16.msra.mxu0 %v547
  %566 = vmatprep.subr.bf16.mxu0 0
  %567 = vmatpush1.bf16.msra.mxu0 %v548
  %568 = vmatprep.subr.bf16.mxu0 0
  %569 = vmatpush1.bf16.msra.mxu0 %v549
  %570 = vmatprep.subr.bf16.mxu0 0
  %571 = vmatpush1.bf16.msra.mxu0 %v550
  %572 = vmatprep.subr.bf16.mxu0 0
  %573 = vmatpush1.bf16.msra.mxu0 %v551
  %574 = vmatprep.subr.bf16.mxu0 0
  %575 = vmatpush1.bf16.msra.mxu0 %v552
  %576 = vmatprep.subr.bf16.mxu0 0
  %577 = vmatpush1.bf16.msra.mxu0 %v553
  %578 = vmatprep.subr.bf16.mxu0 0
  %579 = vmatpush1.bf16.msra.mxu0 0
  %580 = vmatprep.subr.bf16.mxu0 0
  %581 = vmatpush1.bf16.msra.mxu0 0
  %582 = vmatprep.subr.bf16.mxu0 0
  %583 = vmatpush1.bf16.msra.mxu0 0
  %584 = vmatprep.subr.bf16.mxu0 0
  %585 = vmatpush1.bf16.msra.mxu0 0
  %586 = vmatprep.subr.bf16.mxu0 0
  %587 = vmatpush1.bf16.msra.mxu0 0
  %588 = vmatprep.subr.bf16.mxu0 0
  %589 = vmatpush1.bf16.msra.mxu0 0
  %590 = vmatprep.subr.bf16.mxu0 0
  %591 = vmatpush1.bf16.msra.mxu0 0
  %592 = vmatprep.subr.bf16.mxu0 0
  %593 = vmatpush1.bf16.msra.mxu0 0
  %594 = vmatprep.mubr.bf16.mxu0 0
  %595 = vmatmul.mubr.bf16.gmra.mrb[0].mxu0 %v508
  %v596 = vpop.f32.mrb[0].mxu0
  %v597 = vadd.f32 0.0, %v596
  %v598 = vpop.f32.mrb[0].mxu0
  %v599 = vpop.f32.mrb[0].mxu0
  %v600 = vadd.f32 0.0, %v599
  %v601 = vpop.f32.mrb[0].mxu0
  %602 = vmatprep.mubr.bf16.mxu0 0
  %603 = vmatmul.mubr.bf16.gmra.mrb[0].mxu0 %v511
  %v604 = vpop.f32.mrb[0].mxu0
  %v605 = vadd.f32 0.0, %v604
  %v606 = vpop.f32.mrb[0].mxu0
  %v607 = vpop.f32.mrb[0].mxu0
  %v608 = vpop.f32.mrb[0].mxu0
  %609 = vdwg.mxu0
  %v626 = vunpack.c.l.b16 %v464
  %v627 = vunpack.c.l.b16 %v465
  %v628 = vunpack.c.l.b16 %v466
  %v629 = vunpack.c.l.b16 %v467
  %v630 = vunpack.c.l.b16 %v468
  %v631 = vunpack.c.l.b16 %v469
  %v632 = vunpack.c.l.b16 %v470
  %v633 = vunpack.c.l.b16 %v471
  %v634 = vunpack.c.l.b16 %v472
  %v635 = vunpack.c.l.b16 %v473
  %v636 = vunpack.c.l.b16 %v474
  %v637 = vunpack.c.l.b16 %v475
  %v638 = vunpack.c.l.b16 %v476
  %v639 = vunpack.c.l.b16 %v477
  %v640 = vunpack.c.l.b16 %v478
  %v641 = vunpack.c.l.b16 %v479
  %v642 = vpack.c.b16 %v627, %v626
  %v643 = vpack.c.b16 %v629, %v628
  %v644 = vpack.c.b16 %v631, %v630
  %v645 = vpack.c.b16 %v633, %v632
  %v646 = vpack.c.b16 %v635, %v634
  %v647 = vpack.c.b16 %v637, %v636
  %v648 = vpack.c.b16 %v639, %v638
  %v649 = vpack.c.b16 %v641, %v640
  %658 = vmatprep.subr.bf16.mxu0 0
  %659 = vmatpush1.bf16.msra.mxu0 %v642
  %660 = vmatprep.subr.bf16.mxu0 0
  %661 = vmatpush1.bf16.msra.mxu0 %v643
  %662 = vmatprep.subr.bf16.mxu0 0
  %663 = vmatpush1.bf16.msra.mxu0 %v644
  %664 = vmatprep.subr.bf16.mxu0 0
  %665 = vmatpush1.bf16.msra.mxu0 %v645
  %666 = vmatprep.subr.bf16.mxu0 0
  %667 = vmatpush1.bf16.msra.mxu0 %v646
  %668 = vmatprep.subr.bf16.mxu0 0
  %669 = vmatpush1.bf16.msra.mxu0 %v647
  %670 = vmatprep.subr.bf16.mxu0 0
  %671 = vmatpush1.bf16.msra.mxu0 %v648
  %672 = vmatprep.subr.bf16.mxu0 0
  %673 = vmatpush1.bf16.msra.mxu0 %v649
  %674 = vmatprep.subr.bf16.mxu0 0
  %675 = vmatpush1.bf16.msra.mxu0 0
  %676 = vmatprep.subr.bf16.mxu0 0
  %677 = vmatpush1.bf16.msra.mxu0 0
  %678 = vmatprep.subr.bf16.mxu0 0
  %679 = vmatpush1.bf16.msra.mxu0 0
  %680 = vmatprep.subr.bf16.mxu0 0
  %681 = vmatpush1.bf16.msra.mxu0 0
  %682 = vmatprep.subr.bf16.mxu0 0
  %683 = vmatpush1.bf16.msra.mxu0 0
  %684 = vmatprep.subr.bf16.mxu0 0
  %685 = vmatpush1.bf16.msra.mxu0 0
  %686 = vmatprep.subr.bf16.mxu0 0
  %687 = vmatpush1.bf16.msra.mxu0 0
  %688 = vmatprep.subr.bf16.mxu0 0
  %689 = vmatpush1.bf16.msra.mxu0 0
  %690 = vmatprep.mubr.bf16.mxu0 0
  %691 = vmatmul.mubr.bf16.gmra.mrb[0].mxu0 %v462
  %v692 = vpop.f32.mrb[0].mxu0
  %v693 = vadd.f32 %v597, %v692
  %v694 = vpop.f32.mrb[0].mxu0
  %v695 = vpop.f32.mrb[0].mxu0
  %v696 = vadd.f32 %v600, %v695
  %v697 = vpop.f32.mrb[0].mxu0
  %698 = vmatprep.mubr.bf16.mxu0 0
  %699 = vmatmul.mubr.bf16.gmra.mrb[0].mxu0 %v463
  %v700 = vpop.f32.mrb[0].mxu0
  %v701 = vadd.f32 %v605, %v700
  %v702 = vpop.f32.mrb[0].mxu0
  %v703 = vpop.f32.mrb[0].mxu0
  %v704 = vpop.f32.mrb[0].mxu0
  %705 = vdwg.mxu0
  %s706 = scalar_lea.vmem %s3, 128
  %v707 = vld [vmem:[%s706] sm:$0xf]
  %v708 = vld [vmem:[%s706 + $0x4] sm:$0xf]
  %v709 = vld [vmem:[%s706 + $0x8] sm:$0xf]
  %v710 = vld [vmem:[%s706 + $0xc] sm:$0xf]
  %v711 = vld [vmem:[%s706 + $0x10] sm:$0xf]
  %v712 = vld [vmem:[%s706 + $0x14] sm:$0xf]
  %v713 = vld [vmem:[%s706 + $0x18] sm:$0xf]
  %v714 = vld [vmem:[%s706 + $0x1c] sm:$0xf]
  %v715 = vld [vmem:[%s706 + $0x20] sm:$0xf]
  %v716 = vld [vmem:[%s706 + $0x24] sm:$0xf]
  %v717 = vld [vmem:[%s706 + $0x28] sm:$0xf]
  %v718 = vld [vmem:[%s706 + $0x2c] sm:$0xf]
  %v719 = vld [vmem:[%s706 + $0x30] sm:$0xf]
  %v720 = vld [vmem:[%s706 + $0x34] sm:$0xf]
  %v721 = vld [vmem:[%s706 + $0x38] sm:$0xf]
  %v722 = vld [vmem:[%s706 + $0x3c] sm:$0xf]
  %v725 = vrot.slane %v462, 1
  %v726 = vrot.slane %v463, 1
  %v727 = vsel %vm322, %v725, %v726
  %v746 = vunpack.c.l.b16 %v707
  %v747 = vunpack.c.l.b16 %v708
  %v748 = vunpack.c.l.b16 %v709
  %v749 = vunpack.c.l.b16 %v710
  %v750 = vunpack.c.l.b16 %v711
  %v751 = vunpack.c.l.b16 %v712
  %v752 = vunpack.c.l.b16 %v713
  %v753 = vunpack.c.l.b16 %v714
  %v754 = vunpack.c.l.b16 %v715
  %v755 = vunpack.c.l.b16 %v716
  %v756 = vunpack.c.l.b16 %v717
  %v757 = vunpack.c.l.b16 %v718
  %v758 = vunpack.c.l.b16 %v719
  %v759 = vunpack.c.l.b16 %v720
  %v760 = vunpack.c.l.b16 %v721
  %v761 = vunpack.c.l.b16 %v722
  %v762 = vpack.c.b16 %v747, %v746
  %v763 = vpack.c.b16 %v749, %v748
  %v764 = vpack.c.b16 %v751, %v750
  %v765 = vpack.c.b16 %v753, %v752
  %v766 = vpack.c.b16 %v755, %v754
  %v767 = vpack.c.b16 %v757, %v756
  %v768 = vpack.c.b16 %v759, %v758
  %v769 = vpack.c.b16 %v761, %v760
  %778 = vmatprep.subr.bf16.mxu0 0
  %779 = vmatpush1.bf16.msra.mxu0 %v762
  %780 = vmatprep.subr.bf16.mxu0 0
  %781 = vmatpush1.bf16.msra.mxu0 %v763
  %782 = vmatprep.subr.bf16.mxu0 0
  %783 = vmatpush1.bf16.msra.mxu0 %v764
  %784 = vmatprep.subr.bf16.mxu0 0
  %785 = vmatpush1.bf16.msra.mxu0 %v765
  %786 = vmatprep.subr.bf16.mxu0 0
  %787 = vmatpush1.bf16.msra.mxu0 %v766
  %788 = vmatprep.subr.bf16.mxu0 0
  %789 = vmatpush1.bf16.msra.mxu0 %v767
  %790 = vmatprep.subr.bf16.mxu0 0
  %791 = vmatpush1.bf16.msra.mxu0 %v768
  %792 = vmatprep.subr.bf16.mxu0 0
  %793 = vmatpush1.bf16.msra.mxu0 %v769
  %794 = vmatprep.subr.bf16.mxu0 0
  %795 = vmatpush1.bf16.msra.mxu0 0
  %796 = vmatprep.subr.bf16.mxu0 0
  %797 = vmatpush1.bf16.msra.mxu0 0
  %798 = vmatprep.subr.bf16.mxu0 0
  %799 = vmatpush1.bf16.msra.mxu0 0
  %800 = vmatprep.subr.bf16.mxu0 0
  %801 = vmatpush1.bf16.msra.mxu0 0
  %802 = vmatprep.subr.bf16.mxu0 0
  %803 = vmatpush1.bf16.msra.mxu0 0
  %804 = vmatprep.subr.bf16.mxu0 0
  %805 = vmatpush1.bf16.msra.mxu0 0
  %806 = vmatprep.subr.bf16.mxu0 0
  %807 = vmatpush1.bf16.msra.mxu0 0
  %808 = vmatprep.subr.bf16.mxu0 0
  %809 = vmatpush1.bf16.msra.mxu0 0
  %810 = vmatprep.mubr.bf16.mxu0 0
  %811 = vmatmul.mubr.bf16.gmra.mrb[0].mxu0 %v727
  %v812 = vpop.f32.mrb[0].mxu0
  %v813 = vadd.f32 0.0, %v812
  %v814 = vpop.f32.mrb[0].mxu0
  %v815 = vpop.f32.mrb[0].mxu0
  %v816 = vadd.f32 0.0, %v815
  %v817 = vpop.f32.mrb[0].mxu0
  %818 = vmatprep.mubr.bf16.mxu0 0
  %819 = vmatmul.mubr.bf16.gmra.mrb[0].mxu0 %v726
  %v820 = vpop.f32.mrb[0].mxu0
  %v821 = vadd.f32 0.0, %v820
  %v822 = vpop.f32.mrb[0].mxu0
  %v823 = vpop.f32.mrb[0].mxu0
  %v824 = vpop.f32.mrb[0].mxu0
  %825 = vdwg.mxu0
  %v826 = vadd.f32 %v693, %v813
  %v827 = vadd.f32 %v696, %v816
  %v828 = vadd.f32 %v701, %v821
  %v829 = vlaneseq
  %v830 = vshrl.u32 %v829, 7
  %v831 = vsub.s32 1, %v830
  %v832 = vrot.slane %v53, %v831
  %v833 = vadd.f32 %v826, %v832
  %v834 = vadd.f32 %v827, %v832
  %v835 = vadd.f32 %v828, %v832
  %v836 = vmax.f32 %v833, 0.0
  %v837 = vmax.f32 %v834, 0.0
  %v838 = vmax.f32 %v835, 0.0
  %v839 = vmul.f32 %v836, %v440
  %v840 = vmul.f32 %v837, %v445
  %v841 = vmul.f32 %v838, %v450
  %842 = vst [vmem:[#allocation3 + $0x1] sm:$0xff] %v839
  %843 = vst [vmem:[#allocation3 + $0x9] sm:$0xff] %v840
  %844 = vst [vmem:[#allocation3 + $0x11] sm:$0xff] %v841
  %v845 = vld [vmem:[#allocation3] sm:$0xff]
  %v846 = vld [vmem:[#allocation3 + $0x8] sm:$0xff]
  %v847 = vld [vmem:[#allocation3 + $0x10] sm:$0xff]
  %v848 = vld [vmem:[#allocation3 + $0x18] sm:$0x3]
  %v849 = vpack.c.bf16 %v846, %v845
  %v850 = vpack.c.bf16 %v848, %v847
  %v851 = vld [vmem:[%s4] sm:$0xf]
  %v852 = vld [vmem:[%s4 + $0x4] sm:$0xf]
  %v853 = vld [vmem:[%s4 + $0x8] sm:$0xf]
  %v854 = vld [vmem:[%s4 + $0xc] sm:$0xf]
  %v855 = vld [vmem:[%s4 + $0x10] sm:$0xf]
  %v856 = vld [vmem:[%s4 + $0x14] sm:$0xf]
  %v857 = vld [vmem:[%s4 + $0x18] sm:$0xf]
  %v858 = vld [vmem:[%s4 + $0x1c] sm:$0xf]
  %v859 = vld [vmem:[%s4 + $0x20] sm:$0xf]
  %v860 = vld [vmem:[%s4 + $0x24] sm:$0xf]
  %v861 = vld [vmem:[%s4 + $0x28] sm:$0xf]
  %v862 = vld [vmem:[%s4 + $0x2c] sm:$0xf]
  %v863 = vld [vmem:[%s4 + $0x30] sm:$0xf]
  %v864 = vld [vmem:[%s4 + $0x34] sm:$0xf]
  %v865 = vld [vmem:[%s4 + $0x38] sm:$0xf]
  %v866 = vld [vmem:[%s4 + $0x3c] sm:$0xf]
  %s867 = scalar_lea.vmem %s4, 64
  %v868 = vld [vmem:[%s867] sm:$0xf]
  %v869 = vld [vmem:[%s867 + $0x4] sm:$0xf]
  %v870 = vld [vmem:[%s867 + $0x8] sm:$0xf]
  %v871 = vld [vmem:[%s867 + $0xc] sm:$0xf]
  %v872 = vld [vmem:[%s867 + $0x10] sm:$0xf]
  %v873 = vld [vmem:[%s867 + $0x14] sm:$0xf]
  %v874 = vld [vmem:[%s867 + $0x18] sm:$0xf]
  %v875 = vld [vmem:[%s867 + $0x1c] sm:$0xf]
  %v876 = vld [vmem:[%s867 + $0x20] sm:$0xf]
  %v877 = vld [vmem:[%s867 + $0x24] sm:$0xf]
  %v878 = vld [vmem:[%s867 + $0x28] sm:$0xf]
  %v879 = vld [vmem:[%s867 + $0x2c] sm:$0xf]
  %v880 = vld [vmem:[%s867 + $0x30] sm:$0xf]
  %v881 = vld [vmem:[%s867 + $0x34] sm:$0xf]
  %v882 = vld [vmem:[%s867 + $0x38] sm:$0xf]
  %v883 = vld [vmem:[%s867 + $0x3c] sm:$0xf]
  %v885 = vshrl.u32 %v849, 16
  %v887 = vshll.u32 %v849, 16
  %v889 = vrot.slane %v887, 1
  %v890 = vor.u32 %v885, %v889
  %v892 = vshll.u32 %v850, 16
  %v894 = vrot.slane %v892, 1
  %v895 = vsel %vm93, %v890, %v894
  %v896 = vshrl.u32 %v850, 16
  %v898 = vor.u32 %v896, %v894
  %v917 = vunpack.c.l.b16 %v868
  %v918 = vunpack.c.l.b16 %v869
  %v919 = vunpack.c.l.b16 %v870
  %v920 = vunpack.c.l.b16 %v871
  %v921 = vunpack.c.l.b16 %v872
  %v922 = vunpack.c.l.b16 %v873
  %v923 = vunpack.c.l.b16 %v874
  %v924 = vunpack.c.l.b16 %v875
  %v925 = vunpack.c.l.b16 %v876
  %v926 = vunpack.c.l.b16 %v877
  %v927 = vunpack.c.l.b16 %v878
  %v928 = vunpack.c.l.b16 %v879
  %v929 = vunpack.c.l.b16 %v880
  %v930 = vunpack.c.l.b16 %v881
  %v931 = vunpack.c.l.b16 %v882
  %v932 = vunpack.c.l.b16 %v883
  %v933 = vpack.c.b16 %v918, %v917
  %v934 = vpack.c.b16 %v920, %v919
  %v935 = vpack.c.b16 %v922, %v921
  %v936 = vpack.c.b16 %v924, %v923
  %v937 = vpack.c.b16 %v926, %v925
  %v938 = vpack.c.b16 %v928, %v927
  %v939 = vpack.c.b16 %v930, %v929
  %v940 = vpack.c.b16 %v932, %v931
  %949 = vmatprep.subr.bf16.mxu0 0
  %950 = vmatpush1.bf16.msra.mxu0 %v933
  %951 = vmatprep.subr.bf16.mxu0 0
  %952 = vmatpush1.bf16.msra.mxu0 %v934
  %953 = vmatprep.subr.bf16.mxu0 0
  %954 = vmatpush1.bf16.msra.mxu0 %v935
  %955 = vmatprep.subr.bf16.mxu0 0
  %956 = vmatpush1.bf16.msra.mxu0 %v936
  %957 = vmatprep.subr.bf16.mxu0 0
  %958 = vmatpush1.bf16.msra.mxu0 %v937
  %959 = vmatprep.subr.bf16.mxu0 0
  %960 = vmatpush1.bf16.msra.mxu0 %v938
  %961 = vmatprep.subr.bf16.mxu0 0
  %962 = vmatpush1.bf16.msra.mxu0 %v939
  %963 = vmatprep.subr.bf16.mxu0 0
  %964 = vmatpush1.bf16.msra.mxu0 %v940
  %965 = vmatprep.subr.bf16.mxu0 0
  %966 = vmatpush1.bf16.msra.mxu0 0
  %967 = vmatprep.subr.bf16.mxu0 0
  %968 = vmatpush1.bf16.msra.mxu0 0
  %969 = vmatprep.subr.bf16.mxu0 0
  %970 = vmatpush1.bf16.msra.mxu0 0
  %971 = vmatprep.subr.bf16.mxu0 0
  %972 = vmatpush1.bf16.msra.mxu0 0
  %973 = vmatprep.subr.bf16.mxu0 0
  %974 = vmatpush1.bf16.msra.mxu0 0
  %975 = vmatprep.subr.bf16.mxu0 0
  %976 = vmatpush1.bf16.msra.mxu0 0
  %977 = vmatprep.subr.bf16.mxu0 0
  %978 = vmatpush1.bf16.msra.mxu0 0
  %979 = vmatprep.subr.bf16.mxu0 0
  %980 = vmatpush1.bf16.msra.mxu0 0
  %981 = vmatprep.mubr.bf16.mxu0 0
  %982 = vmatmul.mubr.bf16.gmra.mrb[0].mxu0 %v895
  %v983 = vpop.f32.mrb[0].mxu0
  %v984 = vadd.f32 0.0, %v983
  %v985 = vpop.f32.mrb[0].mxu0
  %v986 = vpop.f32.mrb[0].mxu0
  %v987 = vadd.f32 0.0, %v986
  %v988 = vpop.f32.mrb[0].mxu0
  %989 = vmatprep.mubr.bf16.mxu0 0
  %990 = vmatmul.mubr.bf16.gmra.mrb[0].mxu0 %v898
  %v991 = vpop.f32.mrb[0].mxu0
  %v992 = vadd.f32 0.0, %v991
  %v993 = vpop.f32.mrb[0].mxu0
  %v994 = vpop.f32.mrb[0].mxu0
  %v995 = vpop.f32.mrb[0].mxu0
  %996 = vdwg.mxu0
  %v1013 = vunpack.c.l.b16 %v851
  %v1014 = vunpack.c.l.b16 %v852
  %v1015 = vunpack.c.l.b16 %v853
  %v1016 = vunpack.c.l.b16 %v854
  %v1017 = vunpack.c.l.b16 %v855
  %v1018 = vunpack.c.l.b16 %v856
  %v1019 = vunpack.c.l.b16 %v857
  %v1020 = vunpack.c.l.b16 %v858
  %v1021 = vunpack.c.l.b16 %v859
  %v1022 = vunpack.c.l.b16 %v860
  %v1023 = vunpack.c.l.b16 %v861
  %v1024 = vunpack.c.l.b16 %v862
  %v1025 = vunpack.c.l.b16 %v863
  %v1026 = vunpack.c.l.b16 %v864
  %v1027 = vunpack.c.l.b16 %v865
  %v1028 = vunpack.c.l.b16 %v866
  %v1029 = vpack.c.b16 %v1014, %v1013
  %v1030 = vpack.c.b16 %v1016, %v1015
  %v1031 = vpack.c.b16 %v1018, %v1017
  %v1032 = vpack.c.b16 %v1020, %v1019
  %v1033 = vpack.c.b16 %v1022, %v1021
  %v1034 = vpack.c.b16 %v1024, %v1023
  %v1035 = vpack.c.b16 %v1026, %v1025
  %v1036 = vpack.c.b16 %v1028, %v1027
  %1045 = vmatprep.subr.bf16.mxu0 0
  %1046 = vmatpush1.bf16.msra.mxu0 %v1029
  %1047 = vmatprep.subr.bf16.mxu0 0
  %1048 = vmatpush1.bf16.msra.mxu0 %v1030
  %1049 = vmatprep.subr.bf16.mxu0 0
  %1050 = vmatpush1.bf16.msra.mxu0 %v1031
  %1051 = vmatprep.subr.bf16.mxu0 0
  %1052 = vmatpush1.bf16.msra.mxu0 %v1032
  %1053 = vmatprep.subr.bf16.mxu0 0
  %1054 = vmatpush1.bf16.msra.mxu0 %v1033
  %1055 = vmatprep.subr.bf16.mxu0 0
  %1056 = vmatpush1.bf16.msra.mxu0 %v1034
  %1057 = vmatprep.subr.bf16.mxu0 0
  %1058 = vmatpush1.bf16.msra.mxu0 %v1035
  %1059 = vmatprep.subr.bf16.mxu0 0
  %1060 = vmatpush1.bf16.msra.mxu0 %v1036
  %1061 = vmatprep.subr.bf16.mxu0 0
  %1062 = vmatpush1.bf16.msra.mxu0 0
  %1063 = vmatprep.subr.bf16.mxu0 0
  %1064 = vmatpush1.bf16.msra.mxu0 0
  %1065 = vmatprep.subr.bf16.mxu0 0
  %1066 = vmatpush1.bf16.msra.mxu0 0
  %1067 = vmatprep.subr.bf16.mxu0 0
  %1068 = vmatpush1.bf16.msra.mxu0 0
  %1069 = vmatprep.subr.bf16.mxu0 0
  %1070 = vmatpush1.bf16.msra.mxu0 0
  %1071 = vmatprep.subr.bf16.mxu0 0
  %1072 = vmatpush1.bf16.msra.mxu0 0
  %1073 = vmatprep.subr.bf16.mxu0 0
  %1074 = vmatpush1.bf16.msra.mxu0 0
  %1075 = vmatprep.subr.bf16.mxu0 0
  %1076 = vmatpush1.bf16.msra.mxu0 0
  %1077 = vmatprep.mubr.bf16.mxu0 0
  %1078 = vmatmul.mubr.bf16.gmra.mrb[0].mxu0 %v849
  %v1079 = vpop.f32.mrb[0].mxu0
  %v1080 = vadd.f32 %v984, %v1079
  %v1081 = vpop.f32.mrb[0].mxu0
  %v1082 = vpop.f32.mrb[0].mxu0
  %v1083 = vadd.f32 %v987, %v1082
  %v1084 = vpop.f32.mrb[0].mxu0
  %1085 = vmatprep.mubr.bf16.mxu0 0
  %1086 = vmatmul.mubr.bf16.gmra.mrb[0].mxu0 %v850
  %v1087 = vpop.f32.mrb[0].mxu0
  %v1088 = vadd.f32 %v992, %v1087
  %v1089 = vpop.f32.mrb[0].mxu0
  %v1090 = vpop.f32.mrb[0].mxu0
  %v1091 = vpop.f32.mrb[0].mxu0
  %1092 = vdwg.mxu0
  %s1093 = scalar_lea.vmem %s4, 128
  %v1094 = vld [vmem:[%s1093] sm:$0xf]
  %v1095 = vld [vmem:[%s1093 + $0x4] sm:$0xf]
  %v1096 = vld [vmem:[%s1093 + $0x8] sm:$0xf]
  %v1097 = vld [vmem:[%s1093 + $0xc] sm:$0xf]
  %v1098 = vld [vmem:[%s1093 + $0x10] sm:$0xf]
  %v1099 = vld [vmem:[%s1093 + $0x14] sm:$0xf]
  %v1100 = vld [vmem:[%s1093 + $0x18] sm:$0xf]
  %v1101 = vld [vmem:[%s1093 + $0x1c] sm:$0xf]
  %v1102 = vld [vmem:[%s1093 + $0x20] sm:$0xf]
  %v1103 = vld [vmem:[%s1093 + $0x24] sm:$0xf]
  %v1104 = vld [vmem:[%s1093 + $0x28] sm:$0xf]
  %v1105 = vld [vmem:[%s1093 + $0x2c] sm:$0xf]
  %v1106 = vld [vmem:[%s1093 + $0x30] sm:$0xf]
  %v1107 = vld [vmem:[%s1093 + $0x34] sm:$0xf]
  %v1108 = vld [vmem:[%s1093 + $0x38] sm:$0xf]
  %v1109 = vld [vmem:[%s1093 + $0x3c] sm:$0xf]
  %v1112 = vrot.slane %v849, 1
  %v1113 = vrot.slane %v850, 1
  %v1114 = vsel %vm322, %v1112, %v1113
  %v1133 = vunpack.c.l.b16 %v1094
  %v1134 = vunpack.c.l.b16 %v1095
  %v1135 = vunpack.c.l.b16 %v1096
  %v1136 = vunpack.c.l.b16 %v1097
  %v1137 = vunpack.c.l.b16 %v1098
  %v1138 = vunpack.c.l.b16 %v1099
  %v1139 = vunpack.c.l.b16 %v1100
  %v1140 = vunpack.c.l.b16 %v1101
  %v1141 = vunpack.c.l.b16 %v1102
  %v1142 = vunpack.c.l.b16 %v1103
  %v1143 = vunpack.c.l.b16 %v1104
  %v1144 = vunpack.c.l.b16 %v1105
  %v1145 = vunpack.c.l.b16 %v1106
  %v1146 = vunpack.c.l.b16 %v1107
  %v1147 = vunpack.c.l.b16 %v1108
  %v1148 = vunpack.c.l.b16 %v1109
  %v1149 = vpack.c.b16 %v1134, %v1133
  %v1150 = vpack.c.b16 %v1136, %v1135
  %v1151 = vpack.c.b16 %v1138, %v1137
  %v1152 = vpack.c.b16 %v1140, %v1139
  %v1153 = vpack.c.b16 %v1142, %v1141
  %v1154 = vpack.c.b16 %v1144, %v1143
  %v1155 = vpack.c.b16 %v1146, %v1145
  %v1156 = vpack.c.b16 %v1148, %v1147
  %1165 = vmatprep.subr.bf16.mxu0 0
  %1166 = vmatpush1.bf16.msra.mxu0 %v1149
  %1167 = vmatprep.subr.bf16.mxu0 0
  %1168 = vmatpush1.bf16.msra.mxu0 %v1150
  %1169 = vmatprep.subr.bf16.mxu0 0
  %1170 = vmatpush1.bf16.msra.mxu0 %v1151
  %1171 = vmatprep.subr.bf16.mxu0 0
  %1172 = vmatpush1.bf16.msra.mxu0 %v1152
  %1173 = vmatprep.subr.bf16.mxu0 0
  %1174 = vmatpush1.bf16.msra.mxu0 %v1153
  %1175 = vmatprep.subr.bf16.mxu0 0
  %1176 = vmatpush1.bf16.msra.mxu0 %v1154
  %1177 = vmatprep.subr.bf16.mxu0 0
  %1178 = vmatpush1.bf16.msra.mxu0 %v1155
  %1179 = vmatprep.subr.bf16.mxu0 0
  %1180 = vmatpush1.bf16.msra.mxu0 %v1156
  %1181 = vmatprep.subr.bf16.mxu0 0
  %1182 = vmatpush1.bf16.msra.mxu0 0
  %1183 = vmatprep.subr.bf16.mxu0 0
  %1184 = vmatpush1.bf16.msra.mxu0 0
  %1185 = vmatprep.subr.bf16.mxu0 0
  %1186 = vmatpush1.bf16.msra.mxu0 0
  %1187 = vmatprep.subr.bf16.mxu0 0
  %1188 = vmatpush1.bf16.msra.mxu0 0
  %1189 = vmatprep.subr.bf16.mxu0 0
  %1190 = vmatpush1.bf16.msra.mxu0 0
  %1191 = vmatprep.subr.bf16.mxu0 0
  %1192 = vmatpush1.bf16.msra.mxu0 0
  %1193 = vmatprep.subr.bf16.mxu0 0
  %1194 = vmatpush1.bf16.msra.mxu0 0
  %1195 = vmatprep.subr.bf16.mxu0 0
  %1196 = vmatpush1.bf16.msra.mxu0 0
  %1197 = vmatprep.mubr.bf16.mxu0 0
  %1198 = vmatmul.mubr.bf16.gmra.mrb[0].mxu0 %v1114
  %v1199 = vpop.f32.mrb[0].mxu0
  %v1200 = vadd.f32 0.0, %v1199
  %v1201 = vpop.f32.mrb[0].mxu0
  %v1202 = vpop.f32.mrb[0].mxu0
  %v1203 = vadd.f32 0.0, %v1202
  %v1204 = vpop.f32.mrb[0].mxu0
  %1205 = vmatprep.mubr.bf16.mxu0 0
  %1206 = vmatmul.mubr.bf16.gmra.mrb[0].mxu0 %v1113
  %v1207 = vpop.f32.mrb[0].mxu0
  %v1208 = vadd.f32 0.0, %v1207
  %v1209 = vpop.f32.mrb[0].mxu0
  %v1210 = vpop.f32.mrb[0].mxu0
  %v1211 = vpop.f32.mrb[0].mxu0
  %1212 = vdwg.mxu0
  %v1213 = vadd.f32 %v1080, %v1200
  %v1214 = vadd.f32 %v1083, %v1203
  %v1215 = vadd.f32 %v1088, %v1208
  %v1216 = vlaneseq
  %v1217 = vshrl.u32 %v1216, 7
  %v1218 = vsub.s32 2, %v1217
  %v1219 = vrot.slane %v53, %v1218
  %v1220 = vadd.f32 %v1213, %v1219
  %v1221 = vadd.f32 %v1214, %v1219
  %v1222 = vadd.f32 %v1215, %v1219
  %v1223 = vmax.f32 %v1220, 0.0
  %v1224 = vmax.f32 %v1221, 0.0
  %v1225 = vmax.f32 %v1222, 0.0
  %v1226 = vmul.f32 %v1223, %v440
  %v1227 = vmul.f32 %v1224, %v445
  %v1228 = vmul.f32 %v1225, %v450
  %1229 = vst [vmem:[%s6] sm:$0xff] %v1226
  %s1230 = scalar_lea.vmem %s6, 8
  %1231 = vst [vmem:[%s1230 - $0x1] sm:$0xfe] %v1227
  %1232 = vst [vmem:[%s1230 + $0x7] sm:$0x1] %v1228
  // Predicated region
  $region26: #{_lambda_.1} parent=0 // pred_check
    _
  $region27: #{_lambda_.1} parent=0 // pred_check_branch
    %1234 = sbr.rel (0) target = $region29
  $region28: #{_lambda_.1} parent=0 // pred_region
    _
  $region29: #{_lambda_.1} parent=0 // pred_fallthru
    _
  // Predicated region
  $region30: #{_lambda_.1} parent=0 // pred_check
    _
  $region31: #{_lambda_.1} parent=0 // pred_check_branch
    %1236 = sbr.rel (0) target = $region33
  $region32: #{_lambda_.1} parent=0 // pred_region
    _
  $region33: #{_lambda_.1} parent=0 // pred_fallthru
    _

</llo_original>
